<compile_context>
chip_gen: v6e
topology: v6e:2x2x1
jax: 0.10.0
libtpu: 0.0.40
codegen_flags: <defaults>
</compile_context>

<pallas_src>
import jax
import jax.numpy as jnp
from jax.experimental import pallas as pl
from jax.experimental.pallas import tpu as pltpu

# ----- model dims (small, consistent with the forward) -----
B = 2            # real batch
BP = 8           # batch padded to one sublane tile
T = 8            # sequence length
P = 4            # odom / pose features per step
L = 32           # laser scan features per step
H = 32           # hidden size
C = 2            # control_dim
OUT_LANES = 128  # lane-dense output width (C padded to full lanes)


def pose_to_control_lstm_kernel(
    odom_ref,                      # (T*BP, P)   time-major, batch padded to 8
    laser_ref,                     # (T*BP, L)
    wp_ref, wl_ref, benc_ref,      # encoder: (P, 2H), (L, 2H), (1, 2H)
    wih_ref, whh_ref, blstm_ref,   # LSTM: (2H, 4H), (H, 4H), (1, 4H)
    wout_ref, bout_ref,            # output head (lane padded): (H, 128), (1, 128)
    out_ref,                       # (BP, 128) lane-dense output
):
    # ---- hoisted, h-independent input path: all T timesteps at once ----
    # The two encoders write disjoint column halves of their zero-extended weights,
    # so summing the matmuls == concat(relu(pose_enc), relu(laser_enc)).
    x_all = jnp.maximum(
        jnp.dot(odom_ref[...], wp_ref[...], preferred_element_type=jnp.float32)
        + jnp.dot(laser_ref[...], wl_ref[...], preferred_element_type=jnp.float32)
        + benc_ref[...], 0.0)                                   # (T*BP, 2H)
    gates_in = (
        jnp.dot(x_all, wih_ref[...], preferred_element_type=jnp.float32)
        + blstm_ref[...])                                       # (T*BP, 4H)

    whh = whh_ref[...]
    h = jnp.zeros((BP, H), jnp.float32)
    c = jnp.zeros((BP, H), jnp.float32)

    # ---- recurrent chain: only h @ W_hh + gate math per step (static unroll, T=8) ----
    for t in range(T):
        gates = gates_in[t * BP:(t + 1) * BP, :] + jnp.dot(
            h, whh, preferred_element_type=jnp.float32)         # (8, 4H) = one vreg
        sig = jax.nn.sigmoid(gates)                             # full-width EUP pass
        tnh = jnp.tanh(gates)                                   # full-width EUP pass
        # Align tanh(g) (lanes [2H:3H]) with sigmoid(i) (lanes [0:H]) via one XLU roll
        # by 2H = 64 lanes (half the vreg -> direction-free).
        ig = (sig * pltpu.roll(tnh, shift=2 * H, axis=1))[:, :H]  # i * tanh(g)
        c = sig[:, H:2 * H] * c + ig                            # f*c + i*g
        h = sig[:, 3 * H:] * jnp.tanh(c)                        # o * tanh(c)

    # ---- lane-dense output head ----
    out_ref[...] = (
        jnp.dot(h, wout_ref[...], preferred_element_type=jnp.float32)
        + bout_ref[...])                                        # (8, 128)


def prepare_params(params):
    """One-time parameter prep (hoisted out of the per-call path)."""
    (wp, bp, wl, bl, wih, whh, blstm, wout, bout) = params
    # Zero-extend encoder weights to disjoint column halves of the 2H LSTM input.
    wp_ext = jnp.zeros((P, 2 * H), jnp.float32).at[:, :H].set(wp)
    wl_ext = jnp.zeros((L, 2 * H), jnp.float32).at[:, H:].set(wl)
    b_enc = jnp.concatenate([bp, bl], axis=-1)                  # (1, 2H)
    # Lane-dense output head: pad C=2 columns to 128 lanes.
    wout_pad = jnp.zeros((H, OUT_LANES), jnp.float32).at[:, :C].set(wout)
    bout_pad = jnp.zeros((1, OUT_LANES), jnp.float32).at[:, :C].set(bout)
    return (wp_ext, wl_ext, b_enc, wih, whh, blstm, wout_pad, bout_pad)


def _forward(odom_tm, laser_tm, prep):
    """odom_tm: (T,B,P), laser_tm: (T,B,L) float32. Returns (B, C)."""
    # Pad batch to one sublane tile and flatten time into the row (sublane) dim.
    odom2d = jnp.pad(odom_tm, ((0, 0), (0, BP - B), (0, 0))).reshape(T * BP, P)
    laser2d = jnp.pad(laser_tm, ((0, 0), (0, BP - B), (0, 0))).reshape(T * BP, L)

    vmem = pl.BlockSpec(memory_space=pltpu.MemorySpace.VMEM)
    out_pad = pl.pallas_call(
        pose_to_control_lstm_kernel,
        out_shape=jax.ShapeDtypeStruct((BP, OUT_LANES), jnp.float32),
        in_specs=[vmem] * 10,
        out_specs=vmem,
    )(odom2d, laser2d, *prep)
    return out_pad[:B, :C]


imitation_net_forward = jax.jit(_forward)


def reference_forward(odom_tm, laser_tm, params):
    (wp, bp, wl, bl, wih, whh, blstm, wout, bout) = params
    h = jnp.zeros((B, H), jnp.float32)
    c = jnp.zeros((B, H), jnp.float32)
    for t in range(T):
        pe = jnp.maximum(odom_tm[t] @ wp + bp, 0.0)
        le = jnp.maximum(laser_tm[t] @ wl + bl, 0.0)
        x = jnp.concatenate([pe, le], axis=-1)
        gates = x @ wih + h @ whh + blstm
        i_g = jax.nn.sigmoid(gates[:, 0 * H:1 * H])
        f_g = jax.nn.sigmoid(gates[:, 1 * H:2 * H])
        g_g = jnp.tanh(gates[:, 2 * H:3 * H])
        o_g = jax.nn.sigmoid(gates[:, 3 * H:4 * H])
        c = f_g * c + i_g * g_g
        h = o_g * jnp.tanh(c)
    return h @ wout + bout


def init_params(key):
    ks = jax.random.split(key, 9)
    s = 0.1
    wp = s * jax.random.normal(ks[0], (P, H), jnp.float32)
    bp = s * jax.random.normal(ks[1], (1, H), jnp.float32)
    wl = s * jax.random.normal(ks[2], (L, H), jnp.float32)
    bl = s * jax.random.normal(ks[3], (1, H), jnp.float32)
    wih = s * jax.random.normal(ks[4], (2 * H, 4 * H), jnp.float32)
    whh = s * jax.random.normal(ks[5], (H, 4 * H), jnp.float32)
    blstm = s * jax.random.normal(ks[6], (1, 4 * H), jnp.float32)
    wout = s * jax.random.normal(ks[7], (H, C), jnp.float32)
    bout = s * jax.random.normal(ks[8], (1, C), jnp.float32)
    return (wp, bp, wl, bl, wih, whh, blstm, wout, bout)


if __name__ == "__main__":
    key = jax.random.PRNGKey(0)
    k_odom, k_laser, k_params = jax.random.split(key, 3)

    # Time-major inputs (T, B, F), matching the default (seq-first) LSTM layout.
    odom_tm = jax.random.normal(k_odom, (T, B, P), jnp.float32)
    laser_tm = jax.random.normal(k_laser, (T, B, L), jnp.float32)

    params = init_params(k_params)
    prep = prepare_params(params)          # one-time weight prep, not per call

    control = imitation_net_forward(odom_tm, laser_tm, prep)
    control = jax.block_until_ready(control)

    ref = reference_forward(odom_tm, laser_tm, params)
    assert control.shape == (B, C)
    assert jnp.allclose(control, ref, atol=1e-4, rtol=1e-4), (control, ref)

    print("KERNEL_OK")
</pallas_src>

<mosaic_0001>
module attributes {stable_mosaic.version = 11 : i64} {
  func.func @pose_to_control_lstm_kernel(%arg0: memref<64x4xf32, #tpu.memory_space<vmem>>, %arg1: memref<64x32xf32, #tpu.memory_space<vmem>>, %arg2: memref<4x64xf32, #tpu.memory_space<vmem>>, %arg3: memref<32x64xf32, #tpu.memory_space<vmem>>, %arg4: memref<1x64xf32, #tpu.memory_space<vmem>>, %arg5: memref<64x128xf32, #tpu.memory_space<vmem>>, %arg6: memref<32x128xf32, #tpu.memory_space<vmem>>, %arg7: memref<1x128xf32, #tpu.memory_space<vmem>>, %arg8: memref<32x128xf32, #tpu.memory_space<vmem>>, %arg9: memref<1x128xf32, #tpu.memory_space<vmem>>, %arg10: memref<8x128xf32, #tpu.memory_space<vmem>>) attributes {dimension_semantics = [], scalar_prefetch = 0 : i64, scratch_operands = 0 : i64, tpu.core_type = #tpu.core_type<tc>} {
    %c0 = arith.constant 0 : index
    %c0_0 = arith.constant 0 : index
    %0 = vector.load %arg0[%c0, %c0_0] : memref<64x4xf32, #tpu.memory_space<vmem>>, vector<64x4xf32>
    %c0_1 = arith.constant 0 : index
    %c0_2 = arith.constant 0 : index
    %1 = vector.load %arg2[%c0_1, %c0_2] : memref<4x64xf32, #tpu.memory_space<vmem>>, vector<4x64xf32>
    %cst = arith.constant dense<0.000000e+00> : vector<64x64xf32>
    %2 = tpu.matmul %0, %1, %cst {dimension_numbers = #tpu.dot_dimension_numbers<[1], [0], [0], [1], [0, 0, 1, 1], [], []>} : vector<64x4xf32>, vector<4x64xf32>, vector<64x64xf32> -> vector<64x64xf32>
    %c0_3 = arith.constant 0 : index
    %c0_4 = arith.constant 0 : index
    %3 = vector.load %arg1[%c0_3, %c0_4] : memref<64x32xf32, #tpu.memory_space<vmem>>, vector<64x32xf32>
    %c0_5 = arith.constant 0 : index
    %c0_6 = arith.constant 0 : index
    %4 = vector.load %arg3[%c0_5, %c0_6] : memref<32x64xf32, #tpu.memory_space<vmem>>, vector<32x64xf32>
    %cst_7 = arith.constant dense<0.000000e+00> : vector<64x64xf32>
    %5 = tpu.matmul %3, %4, %cst_7 {dimension_numbers = #tpu.dot_dimension_numbers<[1], [0], [0], [1], [0, 0, 1, 1], [], []>} : vector<64x32xf32>, vector<32x64xf32>, vector<64x64xf32> -> vector<64x64xf32>
    %6 = arith.addf %2, %5 : vector<64x64xf32>
    %c0_8 = arith.constant 0 : index
    %c0_9 = arith.constant 0 : index
    %7 = vector.load %arg4[%c0_8, %c0_9] : memref<1x64xf32, #tpu.memory_space<vmem>>, vector<1x64xf32>
    %8 = vector.broadcast %7 : vector<1x64xf32> to vector<64x64xf32>
    %9 = arith.addf %6, %8 : vector<64x64xf32>
    %cst_10 = arith.constant 0.000000e+00 : f32
    %10 = vector.broadcast %cst_10 : f32 to vector<64x64xf32>
    %11 = arith.maximumf %9, %10 : vector<64x64xf32>
    %c0_11 = arith.constant 0 : index
    %c0_12 = arith.constant 0 : index
    %12 = vector.load %arg5[%c0_11, %c0_12] : memref<64x128xf32, #tpu.memory_space<vmem>>, vector<64x128xf32>
    %cst_13 = arith.constant dense<0.000000e+00> : vector<64x128xf32>
    %13 = tpu.matmul %11, %12, %cst_13 {dimension_numbers = #tpu.dot_dimension_numbers<[1], [0], [0], [1], [0, 0, 1, 1], [], []>} : vector<64x64xf32>, vector<64x128xf32>, vector<64x128xf32> -> vector<64x128xf32>
    %c0_14 = arith.constant 0 : index
    %c0_15 = arith.constant 0 : index
    %14 = vector.load %arg7[%c0_14, %c0_15] : memref<1x128xf32, #tpu.memory_space<vmem>>, vector<1x128xf32>
    %15 = vector.broadcast %14 : vector<1x128xf32> to vector<64x128xf32>
    %16 = arith.addf %13, %15 : vector<64x128xf32>
    %c0_16 = arith.constant 0 : index
    %c0_17 = arith.constant 0 : index
    %17 = vector.load %arg6[%c0_16, %c0_17] : memref<32x128xf32, #tpu.memory_space<vmem>>, vector<32x128xf32>
    %cst_18 = arith.constant 0.000000e+00 : f32
    %18 = vector.broadcast %cst_18 : f32 to vector<8x32xf32>
    %cst_19 = arith.constant 0.000000e+00 : f32
    %19 = vector.broadcast %cst_19 : f32 to vector<8x32xf32>
    %20 = vector.extract_strided_slice %16 {offsets = [0, 0], sizes = [8, 128], strides = [1, 1]} : vector<64x128xf32> to vector<8x128xf32>
    %cst_20 = arith.constant dense<0.000000e+00> : vector<8x128xf32>
    %21 = tpu.matmul %18, %17, %cst_20 {dimension_numbers = #tpu.dot_dimension_numbers<[1], [0], [0], [1], [0, 0, 1, 1], [], []>} : vector<8x32xf32>, vector<32x128xf32>, vector<8x128xf32> -> vector<8x128xf32>
    %22 = arith.addf %20, %21 : vector<8x128xf32>
    %23 = arith.negf %22 : vector<8x128xf32>
    %24 = math.exp %23 : vector<8x128xf32>
    %cst_21 = arith.constant 1.000000e+00 : f32
    %25 = vector.broadcast %cst_21 : f32 to vector<8x128xf32>
    %26 = arith.addf %25, %24 : vector<8x128xf32>
    %27 = arith.divf %25, %26 : vector<8x128xf32>
    %28 = math.tanh %22 : vector<8x128xf32>
    %c64_i32 = arith.constant 64 : i32
    %29 = tpu.dynamic_rotate %28 by %c64_i32 dim 1 : vector<8x128xf32>, i32 -> vector<8x128xf32>
    %30 = arith.mulf %27, %29 : vector<8x128xf32>
    %31 = vector.extract_strided_slice %30 {offsets = [0, 0], sizes = [8, 32], strides = [1, 1]} : vector<8x128xf32> to vector<8x32xf32>
    %32 = vector.extract_strided_slice %27 {offsets = [0, 32], sizes = [8, 32], strides = [1, 1]} : vector<8x128xf32> to vector<8x32xf32>
    %33 = arith.mulf %32, %19 : vector<8x32xf32>
    %34 = arith.addf %33, %31 : vector<8x32xf32>
    %35 = vector.extract_strided_slice %27 {offsets = [0, 96], sizes = [8, 32], strides = [1, 1]} : vector<8x128xf32> to vector<8x32xf32>
    %36 = math.tanh %34 : vector<8x32xf32>
    %37 = arith.mulf %35, %36 : vector<8x32xf32>
    %38 = vector.extract_strided_slice %16 {offsets = [8, 0], sizes = [8, 128], strides = [1, 1]} : vector<64x128xf32> to vector<8x128xf32>
    %cst_22 = arith.constant dense<0.000000e+00> : vector<8x128xf32>
    %39 = tpu.matmul %37, %17, %cst_22 {dimension_numbers = #tpu.dot_dimension_numbers<[1], [0], [0], [1], [0, 0, 1, 1], [], []>} : vector<8x32xf32>, vector<32x128xf32>, vector<8x128xf32> -> vector<8x128xf32>
    %40 = arith.addf %38, %39 : vector<8x128xf32>
    %41 = arith.negf %40 : vector<8x128xf32>
    %42 = math.exp %41 : vector<8x128xf32>
    %cst_23 = arith.constant 1.000000e+00 : f32
    %43 = vector.broadcast %cst_23 : f32 to vector<8x128xf32>
    %44 = arith.addf %43, %42 : vector<8x128xf32>
    %45 = arith.divf %43, %44 : vector<8x128xf32>
    %46 = math.tanh %40 : vector<8x128xf32>
    %c64_i32_24 = arith.constant 64 : i32
    %47 = tpu.dynamic_rotate %46 by %c64_i32_24 dim 1 : vector<8x128xf32>, i32 -> vector<8x128xf32>
    %48 = arith.mulf %45, %47 : vector<8x128xf32>
    %49 = vector.extract_strided_slice %48 {offsets = [0, 0], sizes = [8, 32], strides = [1, 1]} : vector<8x128xf32> to vector<8x32xf32>
    %50 = vector.extract_strided_slice %45 {offsets = [0, 32], sizes = [8, 32], strides = [1, 1]} : vector<8x128xf32> to vector<8x32xf32>
    %51 = arith.mulf %50, %34 : vector<8x32xf32>
    %52 = arith.addf %51, %49 : vector<8x32xf32>
    %53 = vector.extract_strided_slice %45 {offsets = [0, 96], sizes = [8, 32], strides = [1, 1]} : vector<8x128xf32> to vector<8x32xf32>
    %54 = math.tanh %52 : vector<8x32xf32>
    %55 = arith.mulf %53, %54 : vector<8x32xf32>
    %56 = vector.extract_strided_slice %16 {offsets = [16, 0], sizes = [8, 128], strides = [1, 1]} : vector<64x128xf32> to vector<8x128xf32>
    %cst_25 = arith.constant dense<0.000000e+00> : vector<8x128xf32>
    %57 = tpu.matmul %55, %17, %cst_25 {dimension_numbers = #tpu.dot_dimension_numbers<[1], [0], [0], [1], [0, 0, 1, 1], [], []>} : vector<8x32xf32>, vector<32x128xf32>, vector<8x128xf32> -> vector<8x128xf32>
    %58 = arith.addf %56, %57 : vector<8x128xf32>
    %59 = arith.negf %58 : vector<8x128xf32>
    %60 = math.exp %59 : vector<8x128xf32>
    %cst_26 = arith.constant 1.000000e+00 : f32
    %61 = vector.broadcast %cst_26 : f32 to vector<8x128xf32>
    %62 = arith.addf %61, %60 : vector<8x128xf32>
    %63 = arith.divf %61, %62 : vector<8x128xf32>
    %64 = math.tanh %58 : vector<8x128xf32>
    %c64_i32_27 = arith.constant 64 : i32
    %65 = tpu.dynamic_rotate %64 by %c64_i32_27 dim 1 : vector<8x128xf32>, i32 -> vector<8x128xf32>
    %66 = arith.mulf %63, %65 : vector<8x128xf32>
    %67 = vector.extract_strided_slice %66 {offsets = [0, 0], sizes = [8, 32], strides = [1, 1]} : vector<8x128xf32> to vector<8x32xf32>
    %68 = vector.extract_strided_slice %63 {offsets = [0, 32], sizes = [8, 32], strides = [1, 1]} : vector<8x128xf32> to vector<8x32xf32>
    %69 = arith.mulf %68, %52 : vector<8x32xf32>
    %70 = arith.addf %69, %67 : vector<8x32xf32>
    %71 = vector.extract_strided_slice %63 {offsets = [0, 96], sizes = [8, 32], strides = [1, 1]} : vector<8x128xf32> to vector<8x32xf32>
    %72 = math.tanh %70 : vector<8x32xf32>
    %73 = arith.mulf %71, %72 : vector<8x32xf32>
    %74 = vector.extract_strided_slice %16 {offsets = [24, 0], sizes = [8, 128], strides = [1, 1]} : vector<64x128xf32> to vector<8x128xf32>
    %cst_28 = arith.constant dense<0.000000e+00> : vector<8x128xf32>
    %75 = tpu.matmul %73, %17, %cst_28 {dimension_numbers = #tpu.dot_dimension_numbers<[1], [0], [0], [1], [0, 0, 1, 1], [], []>} : vector<8x32xf32>, vector<32x128xf32>, vector<8x128xf32> -> vector<8x128xf32>
    %76 = arith.addf %74, %75 : vector<8x128xf32>
    %77 = arith.negf %76 : vector<8x128xf32>
    %78 = math.exp %77 : vector<8x128xf32>
    %cst_29 = arith.constant 1.000000e+00 : f32
    %79 = vector.broadcast %cst_29 : f32 to vector<8x128xf32>
    %80 = arith.addf %79, %78 : vector<8x128xf32>
    %81 = arith.divf %79, %80 : vector<8x128xf32>
    %82 = math.tanh %76 : vector<8x128xf32>
    %c64_i32_30 = arith.constant 64 : i32
    %83 = tpu.dynamic_rotate %82 by %c64_i32_30 dim 1 : vector<8x128xf32>, i32 -> vector<8x128xf32>
    %84 = arith.mulf %81, %83 : vector<8x128xf32>
    %85 = vector.extract_strided_slice %84 {offsets = [0, 0], sizes = [8, 32], strides = [1, 1]} : vector<8x128xf32> to vector<8x32xf32>
    %86 = vector.extract_strided_slice %81 {offsets = [0, 32], sizes = [8, 32], strides = [1, 1]} : vector<8x128xf32> to vector<8x32xf32>
    %87 = arith.mulf %86, %70 : vector<8x32xf32>
    %88 = arith.addf %87, %85 : vector<8x32xf32>
    %89 = vector.extract_strided_slice %81 {offsets = [0, 96], sizes = [8, 32], strides = [1, 1]} : vector<8x128xf32> to vector<8x32xf32>
    %90 = math.tanh %88 : vector<8x32xf32>
    %91 = arith.mulf %89, %90 : vector<8x32xf32>
    %92 = vector.extract_strided_slice %16 {offsets = [32, 0], sizes = [8, 128], strides = [1, 1]} : vector<64x128xf32> to vector<8x128xf32>
    %cst_31 = arith.constant dense<0.000000e+00> : vector<8x128xf32>
    %93 = tpu.matmul %91, %17, %cst_31 {dimension_numbers = #tpu.dot_dimension_numbers<[1], [0], [0], [1], [0, 0, 1, 1], [], []>} : vector<8x32xf32>, vector<32x128xf32>, vector<8x128xf32> -> vector<8x128xf32>
    %94 = arith.addf %92, %93 : vector<8x128xf32>
    %95 = arith.negf %94 : vector<8x128xf32>
    %96 = math.exp %95 : vector<8x128xf32>
    %cst_32 = arith.constant 1.000000e+00 : f32
    %97 = vector.broadcast %cst_32 : f32 to vector<8x128xf32>
    %98 = arith.addf %97, %96 : vector<8x128xf32>
    %99 = arith.divf %97, %98 : vector<8x128xf32>
    %100 = math.tanh %94 : vector<8x128xf32>
    %c64_i32_33 = arith.constant 64 : i32
    %101 = tpu.dynamic_rotate %100 by %c64_i32_33 dim 1 : vector<8x128xf32>, i32 -> vector<8x128xf32>
    %102 = arith.mulf %99, %101 : vector<8x128xf32>
    %103 = vector.extract_strided_slice %102 {offsets = [0, 0], sizes = [8, 32], strides = [1, 1]} : vector<8x128xf32> to vector<8x32xf32>
    %104 = vector.extract_strided_slice %99 {offsets = [0, 32], sizes = [8, 32], strides = [1, 1]} : vector<8x128xf32> to vector<8x32xf32>
    %105 = arith.mulf %104, %88 : vector<8x32xf32>
    %106 = arith.addf %105, %103 : vector<8x32xf32>
    %107 = vector.extract_strided_slice %99 {offsets = [0, 96], sizes = [8, 32], strides = [1, 1]} : vector<8x128xf32> to vector<8x32xf32>
    %108 = math.tanh %106 : vector<8x32xf32>
    %109 = arith.mulf %107, %108 : vector<8x32xf32>
    %110 = vector.extract_strided_slice %16 {offsets = [40, 0], sizes = [8, 128], strides = [1, 1]} : vector<64x128xf32> to vector<8x128xf32>
    %cst_34 = arith.constant dense<0.000000e+00> : vector<8x128xf32>
    %111 = tpu.matmul %109, %17, %cst_34 {dimension_numbers = #tpu.dot_dimension_numbers<[1], [0], [0], [1], [0, 0, 1, 1], [], []>} : vector<8x32xf32>, vector<32x128xf32>, vector<8x128xf32> -> vector<8x128xf32>
    %112 = arith.addf %110, %111 : vector<8x128xf32>
    %113 = arith.negf %112 : vector<8x128xf32>
    %114 = math.exp %113 : vector<8x128xf32>
    %cst_35 = arith.constant 1.000000e+00 : f32
    %115 = vector.broadcast %cst_35 : f32 to vector<8x128xf32>
    %116 = arith.addf %115, %114 : vector<8x128xf32>
    %117 = arith.divf %115, %116 : vector<8x128xf32>
    %118 = math.tanh %112 : vector<8x128xf32>
    %c64_i32_36 = arith.constant 64 : i32
    %119 = tpu.dynamic_rotate %118 by %c64_i32_36 dim 1 : vector<8x128xf32>, i32 -> vector<8x128xf32>
    %120 = arith.mulf %117, %119 : vector<8x128xf32>
    %121 = vector.extract_strided_slice %120 {offsets = [0, 0], sizes = [8, 32], strides = [1, 1]} : vector<8x128xf32> to vector<8x32xf32>
    %122 = vector.extract_strided_slice %117 {offsets = [0, 32], sizes = [8, 32], strides = [1, 1]} : vector<8x128xf32> to vector<8x32xf32>
    %123 = arith.mulf %122, %106 : vector<8x32xf32>
    %124 = arith.addf %123, %121 : vector<8x32xf32>
    %125 = vector.extract_strided_slice %117 {offsets = [0, 96], sizes = [8, 32], strides = [1, 1]} : vector<8x128xf32> to vector<8x32xf32>
    %126 = math.tanh %124 : vector<8x32xf32>
    %127 = arith.mulf %125, %126 : vector<8x32xf32>
    %128 = vector.extract_strided_slice %16 {offsets = [48, 0], sizes = [8, 128], strides = [1, 1]} : vector<64x128xf32> to vector<8x128xf32>
    %cst_37 = arith.constant dense<0.000000e+00> : vector<8x128xf32>
    %129 = tpu.matmul %127, %17, %cst_37 {dimension_numbers = #tpu.dot_dimension_numbers<[1], [0], [0], [1], [0, 0, 1, 1], [], []>} : vector<8x32xf32>, vector<32x128xf32>, vector<8x128xf32> -> vector<8x128xf32>
    %130 = arith.addf %128, %129 : vector<8x128xf32>
    %131 = arith.negf %130 : vector<8x128xf32>
    %132 = math.exp %131 : vector<8x128xf32>
    %cst_38 = arith.constant 1.000000e+00 : f32
    %133 = vector.broadcast %cst_38 : f32 to vector<8x128xf32>
    %134 = arith.addf %133, %132 : vector<8x128xf32>
    %135 = arith.divf %133, %134 : vector<8x128xf32>
    %136 = math.tanh %130 : vector<8x128xf32>
    %c64_i32_39 = arith.constant 64 : i32
    %137 = tpu.dynamic_rotate %136 by %c64_i32_39 dim 1 : vector<8x128xf32>, i32 -> vector<8x128xf32>
    %138 = arith.mulf %135, %137 : vector<8x128xf32>
    %139 = vector.extract_strided_slice %138 {offsets = [0, 0], sizes = [8, 32], strides = [1, 1]} : vector<8x128xf32> to vector<8x32xf32>
    %140 = vector.extract_strided_slice %135 {offsets = [0, 32], sizes = [8, 32], strides = [1, 1]} : vector<8x128xf32> to vector<8x32xf32>
    %141 = arith.mulf %140, %124 : vector<8x32xf32>
    %142 = arith.addf %141, %139 : vector<8x32xf32>
    %143 = vector.extract_strided_slice %135 {offsets = [0, 96], sizes = [8, 32], strides = [1, 1]} : vector<8x128xf32> to vector<8x32xf32>
    %144 = math.tanh %142 : vector<8x32xf32>
    %145 = arith.mulf %143, %144 : vector<8x32xf32>
    %146 = vector.extract_strided_slice %16 {offsets = [56, 0], sizes = [8, 128], strides = [1, 1]} : vector<64x128xf32> to vector<8x128xf32>
    %cst_40 = arith.constant dense<0.000000e+00> : vector<8x128xf32>
    %147 = tpu.matmul %145, %17, %cst_40 {dimension_numbers = #tpu.dot_dimension_numbers<[1], [0], [0], [1], [0, 0, 1, 1], [], []>} : vector<8x32xf32>, vector<32x128xf32>, vector<8x128xf32> -> vector<8x128xf32>
    %148 = arith.addf %146, %147 : vector<8x128xf32>
    %149 = arith.negf %148 : vector<8x128xf32>
    %150 = math.exp %149 : vector<8x128xf32>
    %cst_41 = arith.constant 1.000000e+00 : f32
    %151 = vector.broadcast %cst_41 : f32 to vector<8x128xf32>
    %152 = arith.addf %151, %150 : vector<8x128xf32>
    %153 = arith.divf %151, %152 : vector<8x128xf32>
    %154 = math.tanh %148 : vector<8x128xf32>
    %c64_i32_42 = arith.constant 64 : i32
    %155 = tpu.dynamic_rotate %154 by %c64_i32_42 dim 1 : vector<8x128xf32>, i32 -> vector<8x128xf32>
    %156 = arith.mulf %153, %155 : vector<8x128xf32>
    %157 = vector.extract_strided_slice %156 {offsets = [0, 0], sizes = [8, 32], strides = [1, 1]} : vector<8x128xf32> to vector<8x32xf32>
    %158 = vector.extract_strided_slice %153 {offsets = [0, 32], sizes = [8, 32], strides = [1, 1]} : vector<8x128xf32> to vector<8x32xf32>
    %159 = arith.mulf %158, %142 : vector<8x32xf32>
    %160 = arith.addf %159, %157 : vector<8x32xf32>
    %161 = vector.extract_strided_slice %153 {offsets = [0, 96], sizes = [8, 32], strides = [1, 1]} : vector<8x128xf32> to vector<8x32xf32>
    %162 = math.tanh %160 : vector<8x32xf32>
    %163 = arith.mulf %161, %162 : vector<8x32xf32>
    %c0_43 = arith.constant 0 : index
    %c0_44 = arith.constant 0 : index
    %164 = vector.load %arg8[%c0_43, %c0_44] : memref<32x128xf32, #tpu.memory_space<vmem>>, vector<32x128xf32>
    %cst_45 = arith.constant dense<0.000000e+00> : vector<8x128xf32>
    %165 = tpu.matmul %163, %164, %cst_45 {dimension_numbers = #tpu.dot_dimension_numbers<[1], [0], [0], [1], [0, 0, 1, 1], [], []>} : vector<8x32xf32>, vector<32x128xf32>, vector<8x128xf32> -> vector<8x128xf32>
    %c0_46 = arith.constant 0 : index
    %c0_47 = arith.constant 0 : index
    %166 = vector.load %arg9[%c0_46, %c0_47] : memref<1x128xf32, #tpu.memory_space<vmem>>, vector<1x128xf32>
    %167 = vector.broadcast %166 : vector<1x128xf32> to vector<8x128xf32>
    %168 = arith.addf %165, %167 : vector<8x128xf32>
    %c0_48 = arith.constant 0 : index
    %c0_49 = arith.constant 0 : index
    %169 = vector.load %arg10[%c0_48, %c0_49] : memref<8x128xf32, #tpu.memory_space<vmem>>, vector<8x128xf32>
    tpu.vector_store %arg10[%c0_48, %c0_49], %168 {strides = array<i32>} : memref<8x128xf32, #tpu.memory_space<vmem>>, vector<8x128xf32>,
    return
  }
}

</mosaic_0001>

<llo_original>
// kernel: _forward.1
$region0: #{_forward.1}
  #allocation0 [shape = 'u32[]', space=smem, size = 0x4, offset = 0x4, fixed_abs, tag = 'smem constant byte address 0x4 - core index']
  #allocation1 [shape = 'u32[144,128]{1,0:T(1,128)}', space=vmem, size = 0x12000, scoped, tag = 'internal scratch']
  %s0 = inlined_call_operand.vmem [shape: f32[64,4], index: 0, kind: input, shape index: {}]
  %s1 = inlined_call_operand.vmem [shape: f32[64,32], index: 1, kind: input, shape index: {}]
  %s2 = inlined_call_operand.vmem [shape: f32[4,64], index: 2, kind: input, shape index: {}]
  %s3 = inlined_call_operand.vmem [shape: f32[32,64], index: 3, kind: input, shape index: {}]
  %s4 = inlined_call_operand.vmem [shape: f32[1,64], index: 4, kind: input, shape index: {}]
  %s5 = inlined_call_operand.vmem [shape: f32[64,128], index: 5, kind: input, shape index: {}]
  %s6 = inlined_call_operand.vmem [shape: f32[32,128], index: 6, kind: input, shape index: {}]
  %s7 = inlined_call_operand.vmem [shape: f32[1,128], index: 7, kind: input, shape index: {}]
  %s8 = inlined_call_operand.vmem [shape: f32[32,128], index: 8, kind: input, shape index: {}]
  %s9 = inlined_call_operand.vmem [shape: f32[1,128], index: 9, kind: input, shape index: {}]
  %s10 = inlined_call_operand.vmem [shape: f32[8,128], index: 10, kind: output, shape index: {}]
  %s11 = sld [smem:[#allocation0]]
  $region50: #{_forward.1} parent=0
    _
  %s13 = ssub.s32 1, %s11
  %s14 = scalar_select 0, %s13, %s11
  // Predicated region
  $region2: #{_forward.1} parent=0 // pred_check
    _
  $region3: #{_forward.1} parent=0 // pred_check_branch
    %16 = sbr.rel (0) target = $region5
  $region4: #{_forward.1} parent=0 // pred_region
    _
  $region5: #{_forward.1} parent=0 // pred_fallthru
    _
  // Predicated region
  $region6: #{_forward.1} parent=0 // pred_check
    _
  $region7: #{_forward.1} parent=0 // pred_check_branch
    %18 = sbr.rel (0) target = $region9
  $region8: #{_forward.1} parent=0 // pred_region
    _
  $region9: #{_forward.1} parent=0 // pred_fallthru
    _
  // Predicated region
  $region10: #{_forward.1} parent=0 // pred_check
    _
  $region11: #{_forward.1} parent=0 // pred_check_branch
    %20 = sbr.rel (0) target = $region13
  $region12: #{_forward.1} parent=0 // pred_region
    _
  $region13: #{_forward.1} parent=0 // pred_fallthru
    _
  // Predicated region
  $region14: #{_forward.1} parent=0 // pred_check
    _
  $region15: #{_forward.1} parent=0 // pred_check_branch
    %22 = sbr.rel (0) target = $region17
  $region16: #{_forward.1} parent=0 // pred_region
    _
  $region17: #{_forward.1} parent=0 // pred_fallthru
    _
  // Predicated region
  $region18: #{_forward.1} parent=0 // pred_check
    _
  $region19: #{_forward.1} parent=0 // pred_check_branch
    %24 = sbr.rel (0) target = $region21
  $region20: #{_forward.1} parent=0 // pred_region
    _
  $region21: #{_forward.1} parent=0 // pred_fallthru
    _
  // Predicated region
  $region22: #{_forward.1} parent=0 // pred_check
    _
  $region23: #{_forward.1} parent=0 // pred_check_branch
    %26 = sbr.rel (0) target = $region25
  $region24: #{_forward.1} parent=0 // pred_region
    _
  $region25: #{_forward.1} parent=0 // pred_fallthru
    _
  // Predicated region
  $region26: #{_forward.1} parent=0 // pred_check
    _
  $region27: #{_forward.1} parent=0 // pred_check_branch
    %28 = sbr.rel (0) target = $region29
  $region28: #{_forward.1} parent=0 // pred_region
    _
  $region29: #{_forward.1} parent=0 // pred_fallthru
    _
  // Predicated region
  $region30: #{_forward.1} parent=0 // pred_check
    _
  $region31: #{_forward.1} parent=0 // pred_check_branch
    %30 = sbr.rel (0) target = $region33
  $region32: #{_forward.1} parent=0 // pred_region
    _
  $region33: #{_forward.1} parent=0 // pred_fallthru
    _
  // Predicated region
  $region34: #{_forward.1} parent=0 // pred_check
    _
  $region35: #{_forward.1} parent=0 // pred_check_branch
    %32 = sbr.rel (0) target = $region37
  $region36: #{_forward.1} parent=0 // pred_region
    _
  $region37: #{_forward.1} parent=0 // pred_fallthru
    _
  // Predicated region
  $region38: #{_forward.1} parent=0 // pred_check
    _
  $region39: #{_forward.1} parent=0 // pred_check_branch
    %34 = sbr.rel (0) target = $region41
  $region40: #{_forward.1} parent=0 // pred_region
    _
  $region41: #{_forward.1} parent=0 // pred_fallthru
    _
  %v35 = vld [vmem:[%s0] sm:$0xff]
  %v36 = vld [vmem:[%s0 + $0x8] sm:$0xff]
  %v37 = vld [vmem:[%s0 + $0x10] sm:$0xff]
  %v38 = vld [vmem:[%s0 + $0x18] sm:$0xff]
  %v39 = vld [vmem:[%s0 + $0x20] sm:$0xff]
  %v40 = vld [vmem:[%s0 + $0x28] sm:$0xff]
  %v41 = vld [vmem:[%s0 + $0x30] sm:$0xff]
  %v42 = vld [vmem:[%s0 + $0x38] sm:$0xff]
  %v43 = vld [vmem:[%s2] sm:$0xf]
  %v44 = vld [vmem:[%s1] sm:$0xff]
  %v45 = vld [vmem:[%s1 + $0x8] sm:$0xff]
  %v46 = vld [vmem:[%s1 + $0x10] sm:$0xff]
  %v47 = vld [vmem:[%s1 + $0x18] sm:$0xff]
  %v48 = vld [vmem:[%s1 + $0x20] sm:$0xff]
  %v49 = vld [vmem:[%s1 + $0x28] sm:$0xff]
  %v50 = vld [vmem:[%s1 + $0x30] sm:$0xff]
  %v51 = vld [vmem:[%s1 + $0x38] sm:$0xff]
  %v52 = vld [vmem:[%s3] sm:$0xff]
  %v53 = vld [vmem:[%s3 + $0x8] sm:$0xff]
  %v54 = vld [vmem:[%s3 + $0x10] sm:$0xff]
  %v55 = vld [vmem:[%s3 + $0x18] sm:$0xff]
  %vm56 = vcmask 261120
  %v58 = vsel %vm56, %v44, 0
  %v61 = vsel %vm56, %v45, 0
  %v64 = vsel %vm56, %v46, 0
  %v67 = vsel %vm56, %v47, 0
  %v70 = vsel %vm56, %v48, 0
  %v73 = vsel %vm56, %v49, 0
  %v76 = vsel %vm56, %v50, 0
  %v79 = vsel %vm56, %v51, 0
  %81 = vmatprep.subr.mxu0 0.0
  %82 = vmatpush1.msra.mxu0 0.0
  %83 = vmatprep.subr.mxu0 0.0
  %84 = vmatpush1.msra.mxu0 0.0
  %85 = vmatprep.subr.mxu0 0.0
  %86 = vmatpush1.msra.mxu0 0.0
  %87 = vmatprep.subr.mxu0 0.0
  %88 = vmatpush1.msra.mxu0 0.0
  %89 = vmatprep.subr.mxu0 0.0
  %90 = vmatpush1.msra.mxu0 0.0
  %91 = vmatprep.subr.mxu0 0.0
  %92 = vmatpush1.msra.mxu0 0.0
  %93 = vmatprep.subr.mxu0 0.0
  %94 = vmatpush1.msra.mxu0 0.0
  %95 = vmatprep.subr.mxu0 0.0
  %96 = vmatpush1.msra.mxu0 0.0
  %97 = vmatprep.subr.mxu0 0.0
  %98 = vmatpush1.msra.mxu0 0.0
  %99 = vmatprep.subr.mxu0 0.0
  %100 = vmatpush1.msra.mxu0 0.0
  %101 = vmatprep.subr.mxu0 0.0
  %102 = vmatpush1.msra.mxu0 0.0
  %103 = vmatprep.subr.mxu0 0.0
  %104 = vmatpush1.msra.mxu0 0.0
  %105 = vmatprep.subr.mxu0 0.0
  %106 = vmatpush1.msra.mxu0 %v55
  %107 = vmatprep.subr.mxu0 0.0
  %108 = vmatpush1.msra.mxu0 %v54
  %109 = vmatprep.subr.mxu0 0.0
  %110 = vmatpush1.msra.mxu0 %v53
  %111 = vmatprep.subr.mxu0 0.0
  %112 = vmatpush1.msra.mxu0 %v52
  %113 = vmatprep.subr.mxu0 0.0
  %114 = vmatpush2.msra.mxu0 0.0
  %115 = vmatprep.subr.mxu0 0.0
  %116 = vmatpush2.msra.mxu0 0.0
  %117 = vmatprep.subr.mxu0 0.0
  %118 = vmatpush2.msra.mxu0 0.0
  %119 = vmatprep.subr.mxu0 0.0
  %120 = vmatpush2.msra.mxu0 0.0
  %121 = vmatprep.subr.mxu0 0.0
  %122 = vmatpush2.msra.mxu0 0.0
  %123 = vmatprep.subr.mxu0 0.0
  %124 = vmatpush2.msra.mxu0 0.0
  %125 = vmatprep.subr.mxu0 0.0
  %126 = vmatpush2.msra.mxu0 0.0
  %127 = vmatprep.subr.mxu0 0.0
  %128 = vmatpush2.msra.mxu0 0.0
  %129 = vmatprep.subr.mxu0 0.0
  %130 = vmatpush2.msra.mxu0 0.0
  %131 = vmatprep.subr.mxu0 0.0
  %132 = vmatpush2.msra.mxu0 0.0
  %133 = vmatprep.subr.mxu0 0.0
  %134 = vmatpush2.msra.mxu0 0.0
  %135 = vmatprep.subr.mxu0 0.0
  %136 = vmatpush2.msra.mxu0 0.0
  %137 = vmatprep.subr.mxu0 0.0
  %138 = vmatpush2.msra.mxu0 0.0
  %139 = vmatprep.subr.mxu0 0.0
  %140 = vmatpush2.msra.mxu0 0.0
  %141 = vmatprep.subr.mxu0 0.0
  %142 = vmatpush2.msra.mxu0 0.0
  %143 = vmatprep.subr.mxu0 0.0
  %144 = vmatpush2.msra.mxu0 0.0
  %145 = vmatprep.mubr.f32.mxu0 0.0
  %146 = vmatmul.mubr.f32.gmra.mxu0 %v58
  %v147 = vpop.f32.mrf.mxu0
  %v148 = vadd.f32 0.0, %v147
  %v149 = vpop.f32.mrf.mxu0
  %150 = vmatprep.mubr.f32.mxu0 0.0
  %151 = vmatmul.mubr.f32.gmra.mxu0 %v61
  %v152 = vpop.f32.mrf.mxu0
  %v153 = vadd.f32 0.0, %v152
  %v154 = vpop.f32.mrf.mxu0
  %155 = vmatprep.mubr.f32.mxu0 0.0
  %156 = vmatmul.mubr.f32.gmra.mxu0 %v64
  %v157 = vpop.f32.mrf.mxu0
  %v158 = vadd.f32 0.0, %v157
  %v159 = vpop.f32.mrf.mxu0
  %160 = vmatprep.mubr.f32.mxu0 0.0
  %161 = vmatmul.mubr.f32.gmra.mxu0 %v67
  %v162 = vpop.f32.mrf.mxu0
  %v163 = vadd.f32 0.0, %v162
  %v164 = vpop.f32.mrf.mxu0
  %165 = vmatprep.mubr.f32.mxu0 0.0
  %166 = vmatmul.mubr.f32.gmra.mxu0 %v70
  %v167 = vpop.f32.mrf.mxu0
  %v168 = vadd.f32 0.0, %v167
  %v169 = vpop.f32.mrf.mxu0
  %170 = vmatprep.mubr.f32.mxu0 0.0
  %171 = vmatmul.mubr.f32.gmra.mxu0 %v73
  %v172 = vpop.f32.mrf.mxu0
  %v173 = vadd.f32 0.0, %v172
  %v174 = vpop.f32.mrf.mxu0
  %175 = vmatprep.mubr.f32.mxu0 0.0
  %176 = vmatmul.mubr.f32.gmra.mxu0 %v76
  %v177 = vpop.f32.mrf.mxu0
  %v178 = vadd.f32 0.0, %v177
  %v179 = vpop.f32.mrf.mxu0
  %180 = vmatprep.mubr.f32.mxu0 0.0
  %181 = vmatmul.mubr.f32.gmra.mxu0 %v79
  %v182 = vpop.f32.mrf.mxu0
  %v183 = vadd.f32 0.0, %v182
  %v184 = vpop.f32.mrf.mxu0
  %185 = vdwg.mxu0
  %vm186 = vcmask 31744
  %v188 = vsel %vm186, %v35, 0
  %v191 = vsel %vm186, %v36, 0
  %v194 = vsel %vm186, %v37, 0
  %v197 = vsel %vm186, %v38, 0
  %v200 = vsel %vm186, %v39, 0
  %v203 = vsel %vm186, %v40, 0
  %v206 = vsel %vm186, %v41, 0
  %v209 = vsel %vm186, %v42, 0
  %vm211 = vcmask 1043456
  %v213 = vsel %vm211, %v43, 0
  %215 = vmatprep.subr.mxu0 0.0
  %216 = vmatpush1.msra.mxu0 0.0
  %217 = vmatprep.subr.mxu0 0.0
  %218 = vmatpush1.msra.mxu0 0.0
  %219 = vmatprep.subr.mxu0 0.0
  %220 = vmatpush1.msra.mxu0 0.0
  %221 = vmatprep.subr.mxu0 0.0
  %222 = vmatpush1.msra.mxu0 0.0
  %223 = vmatprep.subr.mxu0 0.0
  %224 = vmatpush1.msra.mxu0 0.0
  %225 = vmatprep.subr.mxu0 0.0
  %226 = vmatpush1.msra.mxu0 0.0
  %227 = vmatprep.subr.mxu0 0.0
  %228 = vmatpush1.msra.mxu0 0.0
  %229 = vmatprep.subr.mxu0 0.0
  %230 = vmatpush1.msra.mxu0 0.0
  %231 = vmatprep.subr.mxu0 0.0
  %232 = vmatpush1.msra.mxu0 0.0
  %233 = vmatprep.subr.mxu0 0.0
  %234 = vmatpush1.msra.mxu0 0.0
  %235 = vmatprep.subr.mxu0 0.0
  %236 = vmatpush1.msra.mxu0 0.0
  %237 = vmatprep.subr.mxu0 0.0
  %238 = vmatpush1.msra.mxu0 0.0
  %239 = vmatprep.subr.mxu0 0.0
  %240 = vmatpush1.msra.mxu0 0.0
  %241 = vmatprep.subr.mxu0 0.0
  %242 = vmatpush1.msra.mxu0 0.0
  %243 = vmatprep.subr.mxu0 0.0
  %244 = vmatpush1.msra.mxu0 0.0
  %245 = vmatprep.subr.mxu0 0.0
  %246 = vmatpush1.msra.mxu0 %v213
  %247 = vmatprep.subr.mxu0 0.0
  %248 = vmatpush2.msra.mxu0 0.0
  %249 = vmatprep.subr.mxu0 0.0
  %250 = vmatpush2.msra.mxu0 0.0
  %251 = vmatprep.subr.mxu0 0.0
  %252 = vmatpush2.msra.mxu0 0.0
  %253 = vmatprep.subr.mxu0 0.0
  %254 = vmatpush2.msra.mxu0 0.0
  %255 = vmatprep.subr.mxu0 0.0
  %256 = vmatpush2.msra.mxu0 0.0
  %257 = vmatprep.subr.mxu0 0.0
  %258 = vmatpush2.msra.mxu0 0.0
  %259 = vmatprep.subr.mxu0 0.0
  %260 = vmatpush2.msra.mxu0 0.0
  %261 = vmatprep.subr.mxu0 0.0
  %262 = vmatpush2.msra.mxu0 0.0
  %263 = vmatprep.subr.mxu0 0.0
  %264 = vmatpush2.msra.mxu0 0.0
  %265 = vmatprep.subr.mxu0 0.0
  %266 = vmatpush2.msra.mxu0 0.0
  %267 = vmatprep.subr.mxu0 0.0
  %268 = vmatpush2.msra.mxu0 0.0
  %269 = vmatprep.subr.mxu0 0.0
  %270 = vmatpush2.msra.mxu0 0.0
  %271 = vmatprep.subr.mxu0 0.0
  %272 = vmatpush2.msra.mxu0 0.0
  %273 = vmatprep.subr.mxu0 0.0
  %274 = vmatpush2.msra.mxu0 0.0
  %275 = vmatprep.subr.mxu0 0.0
  %276 = vmatpush2.msra.mxu0 0.0
  %277 = vmatprep.subr.mxu0 0.0
  %278 = vmatpush2.msra.mxu0 0.0
  %279 = vmatprep.mubr.f32.mxu0 0.0
  %280 = vmatmul.mubr.f32.gmra.mxu0 %v188
  %v281 = vpop.f32.mrf.mxu0
  %v282 = vadd.f32 %v148, %v281
  %v283 = vpop.f32.mrf.mxu0
  %284 = vmatprep.mubr.f32.mxu0 0.0
  %285 = vmatmul.mubr.f32.gmra.mxu0 %v191
  %v286 = vpop.f32.mrf.mxu0
  %v287 = vadd.f32 %v153, %v286
  %v288 = vpop.f32.mrf.mxu0
  %289 = vmatprep.mubr.f32.mxu0 0.0
  %290 = vmatmul.mubr.f32.gmra.mxu0 %v194
  %v291 = vpop.f32.mrf.mxu0
  %v292 = vadd.f32 %v158, %v291
  %v293 = vpop.f32.mrf.mxu0
  %294 = vmatprep.mubr.f32.mxu0 0.0
  %295 = vmatmul.mubr.f32.gmra.mxu0 %v197
  %v296 = vpop.f32.mrf.mxu0
  %v297 = vadd.f32 %v163, %v296
  %v298 = vpop.f32.mrf.mxu0
  %299 = vmatprep.mubr.f32.mxu0 0.0
  %300 = vmatmul.mubr.f32.gmra.mxu0 %v200
  %v301 = vpop.f32.mrf.mxu0
  %v302 = vadd.f32 %v168, %v301
  %v303 = vpop.f32.mrf.mxu0
  %304 = vmatprep.mubr.f32.mxu0 0.0
  %305 = vmatmul.mubr.f32.gmra.mxu0 %v203
  %v306 = vpop.f32.mrf.mxu0
  %v307 = vadd.f32 %v173, %v306
  %v308 = vpop.f32.mrf.mxu0
  %309 = vmatprep.mubr.f32.mxu0 0.0
  %310 = vmatmul.mubr.f32.gmra.mxu0 %v206
  %v311 = vpop.f32.mrf.mxu0
  %v312 = vadd.f32 %v178, %v311
  %v313 = vpop.f32.mrf.mxu0
  %314 = vmatprep.mubr.f32.mxu0 0.0
  %315 = vmatmul.mubr.f32.gmra.mxu0 %v209
  %v316 = vpop.f32.mrf.mxu0
  %v317 = vadd.f32 %v183, %v316
  %v318 = vpop.f32.mrf.mxu0
  %319 = vdwg.mxu0
  %v320 = vld [vmem:[%s4] sm:$0x1]
  %v322 = vlaneseq
  %v323 = vshrl.u32 %v322, 7
  %v324 = vsub.s32 0, %v323
  %v325 = vrot.slane %v320, %v324
  %v327 = vadd.f32 %v282, %v325
  %v328 = vadd.f32 %v287, %v325
  %v329 = vadd.f32 %v292, %v325
  %v330 = vadd.f32 %v297, %v325
  %v331 = vadd.f32 %v302, %v325
  %v332 = vadd.f32 %v307, %v325
  %v333 = vadd.f32 %v312, %v325
  %v334 = vadd.f32 %v317, %v325
  %v335 = vmax.f32 %v327, 0.0
  %v336 = vmax.f32 %v328, 0.0
  %v337 = vmax.f32 %v329, 0.0
  %v338 = vmax.f32 %v330, 0.0
  %v339 = vmax.f32 %v331, 0.0
  %v340 = vmax.f32 %v332, 0.0
  %v341 = vmax.f32 %v333, 0.0
  %v342 = vmax.f32 %v334, 0.0
  %v343 = vld [vmem:[%s5] sm:$0xff]
  %v344 = vld [vmem:[%s5 + $0x8] sm:$0xff]
  %v345 = vld [vmem:[%s5 + $0x10] sm:$0xff]
  %v346 = vld [vmem:[%s5 + $0x18] sm:$0xff]
  %v347 = vld [vmem:[%s5 + $0x20] sm:$0xff]
  %v348 = vld [vmem:[%s5 + $0x28] sm:$0xff]
  %v349 = vld [vmem:[%s5 + $0x30] sm:$0xff]
  %v350 = vld [vmem:[%s5 + $0x38] sm:$0xff]
  %v351 = vld [vmem:[%s7] sm:$0x1]
  %v353 = vlaneseq
  %v354 = vshrl.u32 %v353, 7
  %v355 = vsub.s32 0, %v354
  %v356 = vrot.slane %v351, %v355
  %vm358 = vcmask 523264
  %v360 = vsel %vm358, %v335, 0
  %v363 = vsel %vm358, %v336, 0
  %v366 = vsel %vm358, %v337, 0
  %v369 = vsel %vm358, %v338, 0
  %v372 = vsel %vm358, %v339, 0
  %v375 = vsel %vm358, %v340, 0
  %v378 = vsel %vm358, %v341, 0
  %v381 = vsel %vm358, %v342, 0
  %383 = vmatprep.subr.mxu0 0.0
  %384 = vmatpush1.msra.mxu0 0.0
  %385 = vmatprep.subr.mxu0 0.0
  %386 = vmatpush1.msra.mxu0 0.0
  %387 = vmatprep.subr.mxu0 0.0
  %388 = vmatpush1.msra.mxu0 0.0
  %389 = vmatprep.subr.mxu0 0.0
  %390 = vmatpush1.msra.mxu0 0.0
  %391 = vmatprep.subr.mxu0 0.0
  %392 = vmatpush1.msra.mxu0 0.0
  %393 = vmatprep.subr.mxu0 0.0
  %394 = vmatpush1.msra.mxu0 0.0
  %395 = vmatprep.subr.mxu0 0.0
  %396 = vmatpush1.msra.mxu0 0.0
  %397 = vmatprep.subr.mxu0 0.0
  %398 = vmatpush1.msra.mxu0 0.0
  %399 = vmatprep.subr.mxu0 0.0
  %400 = vmatpush1.msra.mxu0 %v350
  %401 = vmatprep.subr.mxu0 0.0
  %402 = vmatpush1.msra.mxu0 %v349
  %403 = vmatprep.subr.mxu0 0.0
  %404 = vmatpush1.msra.mxu0 %v348
  %405 = vmatprep.subr.mxu0 0.0
  %406 = vmatpush1.msra.mxu0 %v347
  %407 = vmatprep.subr.mxu0 0.0
  %408 = vmatpush1.msra.mxu0 %v346
  %409 = vmatprep.subr.mxu0 0.0
  %410 = vmatpush1.msra.mxu0 %v345
  %411 = vmatprep.subr.mxu0 0.0
  %412 = vmatpush1.msra.mxu0 %v344
  %413 = vmatprep.subr.mxu0 0.0
  %414 = vmatpush1.msra.mxu0 %v343
  %415 = vmatprep.subr.mxu0 0.0
  %416 = vmatpush2.msra.mxu0 0.0
  %417 = vmatprep.subr.mxu0 0.0
  %418 = vmatpush2.msra.mxu0 0.0
  %419 = vmatprep.subr.mxu0 0.0
  %420 = vmatpush2.msra.mxu0 0.0
  %421 = vmatprep.subr.mxu0 0.0
  %422 = vmatpush2.msra.mxu0 0.0
  %423 = vmatprep.subr.mxu0 0.0
  %424 = vmatpush2.msra.mxu0 0.0
  %425 = vmatprep.subr.mxu0 0.0
  %426 = vmatpush2.msra.mxu0 0.0
  %427 = vmatprep.subr.mxu0 0.0
  %428 = vmatpush2.msra.mxu0 0.0
  %429 = vmatprep.subr.mxu0 0.0
  %430 = vmatpush2.msra.mxu0 0.0
  %431 = vmatprep.subr.mxu0 0.0
  %432 = vmatpush2.msra.mxu0 0.0
  %433 = vmatprep.subr.mxu0 0.0
  %434 = vmatpush2.msra.mxu0 0.0
  %435 = vmatprep.subr.mxu0 0.0
  %436 = vmatpush2.msra.mxu0 0.0
  %437 = vmatprep.subr.mxu0 0.0
  %438 = vmatpush2.msra.mxu0 0.0
  %439 = vmatprep.subr.mxu0 0.0
  %440 = vmatpush2.msra.mxu0 0.0
  %441 = vmatprep.subr.mxu0 0.0
  %442 = vmatpush2.msra.mxu0 0.0
  %443 = vmatprep.subr.mxu0 0.0
  %444 = vmatpush2.msra.mxu0 0.0
  %445 = vmatprep.subr.mxu0 0.0
  %446 = vmatpush2.msra.mxu0 0.0
  %447 = vmatprep.mubr.f32.mxu0 0.0
  %448 = vmatmul.mubr.f32.gmra.mxu0 %v360
  %v449 = vpop.f32.mrf.mxu0
  %v450 = vadd.f32 %v356, %v449
  %v451 = vpop.f32.mrf.mxu0
  %452 = vmatprep.mubr.f32.mxu0 0.0
  %453 = vmatmul.mubr.f32.gmra.mxu0 %v363
  %v454 = vpop.f32.mrf.mxu0
  %v455 = vadd.f32 %v356, %v454
  %v456 = vpop.f32.mrf.mxu0
  %457 = vmatprep.mubr.f32.mxu0 0.0
  %458 = vmatmul.mubr.f32.gmra.mxu0 %v366
  %v459 = vpop.f32.mrf.mxu0
  %v460 = vadd.f32 %v356, %v459
  %v461 = vpop.f32.mrf.mxu0
  %462 = vmatprep.mubr.f32.mxu0 0.0
  %463 = vmatmul.mubr.f32.gmra.mxu0 %v369
  %v464 = vpop.f32.mrf.mxu0
  %v465 = vadd.f32 %v356, %v464
  %v466 = vpop.f32.mrf.mxu0
  %467 = vmatprep.mubr.f32.mxu0 0.0
  %468 = vmatmul.mubr.f32.gmra.mxu0 %v372
  %v469 = vpop.f32.mrf.mxu0
  %v470 = vadd.f32 %v356, %v469
  %v471 = vpop.f32.mrf.mxu0
  %472 = vmatprep.mubr.f32.mxu0 0.0
  %473 = vmatmul.mubr.f32.gmra.mxu0 %v375
  %v474 = vpop.f32.mrf.mxu0
  %v475 = vadd.f32 %v356, %v474
  %v476 = vpop.f32.mrf.mxu0
  %477 = vmatprep.mubr.f32.mxu0 0.0
  %478 = vmatmul.mubr.f32.gmra.mxu0 %v378
  %v479 = vpop.f32.mrf.mxu0
  %v480 = vadd.f32 %v356, %v479
  %v481 = vpop.f32.mrf.mxu0
  %482 = vmatprep.mubr.f32.mxu0 0.0
  %483 = vmatmul.mubr.f32.gmra.mxu0 %v381
  %v484 = vpop.f32.mrf.mxu0
  %v485 = vadd.f32 %v356, %v484
  %v486 = vpop.f32.mrf.mxu0
  %487 = vdwg.mxu0
  %v488 = vld [vmem:[%s6] sm:$0xff]
  %v489 = vld [vmem:[%s6 + $0x8] sm:$0xff]
  %v490 = vld [vmem:[%s6 + $0x10] sm:$0xff]
  %v491 = vld [vmem:[%s6 + $0x18] sm:$0xff]
  %v493 = vsel %vm56, 0.0, 0
  %495 = vmatprep.subr.mxu0 0.0
  %496 = vmatpush1.msra.mxu0 0.0
  %497 = vmatprep.subr.mxu0 0.0
  %498 = vmatpush1.msra.mxu0 0.0
  %499 = vmatprep.subr.mxu0 0.0
  %500 = vmatpush1.msra.mxu0 0.0
  %501 = vmatprep.subr.mxu0 0.0
  %502 = vmatpush1.msra.mxu0 0.0
  %503 = vmatprep.subr.mxu0 0.0
  %504 = vmatpush1.msra.mxu0 0.0
  %505 = vmatprep.subr.mxu0 0.0
  %506 = vmatpush1.msra.mxu0 0.0
  %507 = vmatprep.subr.mxu0 0.0
  %508 = vmatpush1.msra.mxu0 0.0
  %509 = vmatprep.subr.mxu0 0.0
  %510 = vmatpush1.msra.mxu0 0.0
  %511 = vmatprep.subr.mxu0 0.0
  %512 = vmatpush1.msra.mxu0 0.0
  %513 = vmatprep.subr.mxu0 0.0
  %514 = vmatpush1.msra.mxu0 0.0
  %515 = vmatprep.subr.mxu0 0.0
  %516 = vmatpush1.msra.mxu0 0.0
  %517 = vmatprep.subr.mxu0 0.0
  %518 = vmatpush1.msra.mxu0 0.0
  %519 = vmatprep.subr.mxu0 0.0
  %520 = vmatpush1.msra.mxu0 %v491
  %521 = vmatprep.subr.mxu0 0.0
  %522 = vmatpush1.msra.mxu0 %v490
  %523 = vmatprep.subr.mxu0 0.0
  %524 = vmatpush1.msra.mxu0 %v489
  %525 = vmatprep.subr.mxu0 0.0
  %526 = vmatpush1.msra.mxu0 %v488
  %527 = vmatprep.subr.mxu0 0.0
  %528 = vmatpush2.msra.mxu0 0.0
  %529 = vmatprep.subr.mxu0 0.0
  %530 = vmatpush2.msra.mxu0 0.0
  %531 = vmatprep.subr.mxu0 0.0
  %532 = vmatpush2.msra.mxu0 0.0
  %533 = vmatprep.subr.mxu0 0.0
  %534 = vmatpush2.msra.mxu0 0.0
  %535 = vmatprep.subr.mxu0 0.0
  %536 = vmatpush2.msra.mxu0 0.0
  %537 = vmatprep.subr.mxu0 0.0
  %538 = vmatpush2.msra.mxu0 0.0
  %539 = vmatprep.subr.mxu0 0.0
  %540 = vmatpush2.msra.mxu0 0.0
  %541 = vmatprep.subr.mxu0 0.0
  %542 = vmatpush2.msra.mxu0 0.0
  %543 = vmatprep.subr.mxu0 0.0
  %544 = vmatpush2.msra.mxu0 0.0
  %545 = vmatprep.subr.mxu0 0.0
  %546 = vmatpush2.msra.mxu0 0.0
  %547 = vmatprep.subr.mxu0 0.0
  %548 = vmatpush2.msra.mxu0 0.0
  %549 = vmatprep.subr.mxu0 0.0
  %550 = vmatpush2.msra.mxu0 0.0
  %551 = vmatprep.subr.mxu0 0.0
  %552 = vmatpush2.msra.mxu0 0.0
  %553 = vmatprep.subr.mxu0 0.0
  %554 = vmatpush2.msra.mxu0 0.0
  %555 = vmatprep.subr.mxu0 0.0
  %556 = vmatpush2.msra.mxu0 0.0
  %557 = vmatprep.subr.mxu0 0.0
  %558 = vmatpush2.msra.mxu0 0.0
  %559 = vmatprep.mubr.f32.mxu0 0.0
  %560 = vmatmul.mubr.f32.gmra.mxu0 %v493
  %v561 = vpop.f32.mrf.mxu0
  %v562 = vadd.f32 0.0, %v561
  %v563 = vpop.f32.mrf.mxu0
  %564 = vdwg.mxu0
  %v565 = vadd.f32 %v450, %v562
  %v566 = vxor.u32 %v565, 2147483648
  %v567 = vmul.f32 %v566, 1.442695
  %v568 = vpow.pop %v567
  %v569 = vadd.f32 %v568, 1.0
  %v570 = vrcp.pop %v569
  %v571 = vmul.f32 1.0, %v570
  %v572 = vtanh.pop %v565
  %573 = vrot.lane.b32.xlu0 %v572, 64
  %v574 = vpop.permute.xlu0 %573
  %v575 = vmul.f32 %v571, %v574
  %v576 = vmul.f32 %v571, 0.0
  %578 = vrot.lane.b32.xlu0 %v575, 32
  %v579 = vpop.permute.xlu0 %578
  %v581 = vadd.f32 %v576, %v579
  %v582 = vtanh.pop %v581
  %584 = vrot.lane.b32.xlu0 %v582, 64
  %v585 = vpop.permute.xlu0 %584
  %v587 = vmul.f32 %v571, %v585
  %589 = vrot.lane.b32.xlu0 %v587, 32
  %v590 = vpop.permute.xlu0 %589
  %v591 = vsel %vm56, %v590, 0
  %593 = vmatprep.subr.mxu0 0.0
  %594 = vmatpush1.msra.mxu0 0.0
  %595 = vmatprep.subr.mxu0 0.0
  %596 = vmatpush1.msra.mxu0 0.0
  %597 = vmatprep.subr.mxu0 0.0
  %598 = vmatpush1.msra.mxu0 0.0
  %599 = vmatprep.subr.mxu0 0.0
  %600 = vmatpush1.msra.mxu0 0.0
  %601 = vmatprep.subr.mxu0 0.0
  %602 = vmatpush1.msra.mxu0 0.0
  %603 = vmatprep.subr.mxu0 0.0
  %604 = vmatpush1.msra.mxu0 0.0
  %605 = vmatprep.subr.mxu0 0.0
  %606 = vmatpush1.msra.mxu0 0.0
  %607 = vmatprep.subr.mxu0 0.0
  %608 = vmatpush1.msra.mxu0 0.0
  %609 = vmatprep.subr.mxu0 0.0
  %610 = vmatpush1.msra.mxu0 0.0
  %611 = vmatprep.subr.mxu0 0.0
  %612 = vmatpush1.msra.mxu0 0.0
  %613 = vmatprep.subr.mxu0 0.0
  %614 = vmatpush1.msra.mxu0 0.0
  %615 = vmatprep.subr.mxu0 0.0
  %616 = vmatpush1.msra.mxu0 0.0
  %617 = vmatprep.subr.mxu0 0.0
  %618 = vmatpush1.msra.mxu0 %v491
  %619 = vmatprep.subr.mxu0 0.0
  %620 = vmatpush1.msra.mxu0 %v490
  %621 = vmatprep.subr.mxu0 0.0
  %622 = vmatpush1.msra.mxu0 %v489
  %623 = vmatprep.subr.mxu0 0.0
  %624 = vmatpush1.msra.mxu0 %v488
  %625 = vmatprep.subr.mxu0 0.0
  %626 = vmatpush2.msra.mxu0 0.0
  %627 = vmatprep.subr.mxu0 0.0
  %628 = vmatpush2.msra.mxu0 0.0
  %629 = vmatprep.subr.mxu0 0.0
  %630 = vmatpush2.msra.mxu0 0.0
  %631 = vmatprep.subr.mxu0 0.0
  %632 = vmatpush2.msra.mxu0 0.0
  %633 = vmatprep.subr.mxu0 0.0
  %634 = vmatpush2.msra.mxu0 0.0
  %635 = vmatprep.subr.mxu0 0.0
  %636 = vmatpush2.msra.mxu0 0.0
  %637 = vmatprep.subr.mxu0 0.0
  %638 = vmatpush2.msra.mxu0 0.0
  %639 = vmatprep.subr.mxu0 0.0
  %640 = vmatpush2.msra.mxu0 0.0
  %641 = vmatprep.subr.mxu0 0.0
  %642 = vmatpush2.msra.mxu0 0.0
  %643 = vmatprep.subr.mxu0 0.0
  %644 = vmatpush2.msra.mxu0 0.0
  %645 = vmatprep.subr.mxu0 0.0
  %646 = vmatpush2.msra.mxu0 0.0
  %647 = vmatprep.subr.mxu0 0.0
  %648 = vmatpush2.msra.mxu0 0.0
  %649 = vmatprep.subr.mxu0 0.0
  %650 = vmatpush2.msra.mxu0 0.0
  %651 = vmatprep.subr.mxu0 0.0
  %652 = vmatpush2.msra.mxu0 0.0
  %653 = vmatprep.subr.mxu0 0.0
  %654 = vmatpush2.msra.mxu0 0.0
  %655 = vmatprep.subr.mxu0 0.0
  %656 = vmatpush2.msra.mxu0 0.0
  %657 = vmatprep.mubr.f32.mxu0 0.0
  %658 = vmatmul.mubr.f32.gmra.mxu0 %v591
  %v659 = vpop.f32.mrf.mxu0
  %v660 = vadd.f32 0.0, %v659
  %v661 = vpop.f32.mrf.mxu0
  %662 = vdwg.mxu0
  %v663 = vadd.f32 %v455, %v660
  %v664 = vxor.u32 %v663, 2147483648
  %v665 = vmul.f32 %v664, 1.442695
  %v666 = vpow.pop %v665
  %v667 = vadd.f32 %v666, 1.0
  %v668 = vrcp.pop %v667
  %v669 = vmul.f32 1.0, %v668
  %v670 = vtanh.pop %v663
  %671 = vrot.lane.b32.xlu0 %v670, 64
  %v672 = vpop.permute.xlu0 %671
  %v673 = vmul.f32 %v669, %v672
  %v674 = vmul.f32 %v669, %v581
  %676 = vrot.lane.b32.xlu0 %v673, 32
  %v677 = vpop.permute.xlu0 %676
  %v679 = vadd.f32 %v674, %v677
  %v680 = vtanh.pop %v679
  %682 = vrot.lane.b32.xlu0 %v680, 64
  %v683 = vpop.permute.xlu0 %682
  %v685 = vmul.f32 %v669, %v683
  %687 = vrot.lane.b32.xlu0 %v685, 32
  %v688 = vpop.permute.xlu0 %687
  %v689 = vsel %vm56, %v688, 0
  %691 = vmatprep.subr.mxu0 0.0
  %692 = vmatpush1.msra.mxu0 0.0
  %693 = vmatprep.subr.mxu0 0.0
  %694 = vmatpush1.msra.mxu0 0.0
  %695 = vmatprep.subr.mxu0 0.0
  %696 = vmatpush1.msra.mxu0 0.0
  %697 = vmatprep.subr.mxu0 0.0
  %698 = vmatpush1.msra.mxu0 0.0
  %699 = vmatprep.subr.mxu0 0.0
  %700 = vmatpush1.msra.mxu0 0.0
  %701 = vmatprep.subr.mxu0 0.0
  %702 = vmatpush1.msra.mxu0 0.0
  %703 = vmatprep.subr.mxu0 0.0
  %704 = vmatpush1.msra.mxu0 0.0
  %705 = vmatprep.subr.mxu0 0.0
  %706 = vmatpush1.msra.mxu0 0.0
  %707 = vmatprep.subr.mxu0 0.0
  %708 = vmatpush1.msra.mxu0 0.0
  %709 = vmatprep.subr.mxu0 0.0
  %710 = vmatpush1.msra.mxu0 0.0
  %711 = vmatprep.subr.mxu0 0.0
  %712 = vmatpush1.msra.mxu0 0.0
  %713 = vmatprep.subr.mxu0 0.0
  %714 = vmatpush1.msra.mxu0 0.0
  %715 = vmatprep.subr.mxu0 0.0
  %716 = vmatpush1.msra.mxu0 %v491
  %717 = vmatprep.subr.mxu0 0.0
  %718 = vmatpush1.msra.mxu0 %v490
  %719 = vmatprep.subr.mxu0 0.0
  %720 = vmatpush1.msra.mxu0 %v489
  %721 = vmatprep.subr.mxu0 0.0
  %722 = vmatpush1.msra.mxu0 %v488
  %723 = vmatprep.subr.mxu0 0.0
  %724 = vmatpush2.msra.mxu0 0.0
  %725 = vmatprep.subr.mxu0 0.0
  %726 = vmatpush2.msra.mxu0 0.0
  %727 = vmatprep.subr.mxu0 0.0
  %728 = vmatpush2.msra.mxu0 0.0
  %729 = vmatprep.subr.mxu0 0.0
  %730 = vmatpush2.msra.mxu0 0.0
  %731 = vmatprep.subr.mxu0 0.0
  %732 = vmatpush2.msra.mxu0 0.0
  %733 = vmatprep.subr.mxu0 0.0
  %734 = vmatpush2.msra.mxu0 0.0
  %735 = vmatprep.subr.mxu0 0.0
  %736 = vmatpush2.msra.mxu0 0.0
  %737 = vmatprep.subr.mxu0 0.0
  %738 = vmatpush2.msra.mxu0 0.0
  %739 = vmatprep.subr.mxu0 0.0
  %740 = vmatpush2.msra.mxu0 0.0
  %741 = vmatprep.subr.mxu0 0.0
  %742 = vmatpush2.msra.mxu0 0.0
  %743 = vmatprep.subr.mxu0 0.0
  %744 = vmatpush2.msra.mxu0 0.0
  %745 = vmatprep.subr.mxu0 0.0
  %746 = vmatpush2.msra.mxu0 0.0
  %747 = vmatprep.subr.mxu0 0.0
  %748 = vmatpush2.msra.mxu0 0.0
  %749 = vmatprep.subr.mxu0 0.0
  %750 = vmatpush2.msra.mxu0 0.0
  %751 = vmatprep.subr.mxu0 0.0
  %752 = vmatpush2.msra.mxu0 0.0
  %753 = vmatprep.subr.mxu0 0.0
  %754 = vmatpush2.msra.mxu0 0.0
  %755 = vmatprep.mubr.f32.mxu0 0.0
  %756 = vmatmul.mubr.f32.gmra.mxu0 %v689
  %v757 = vpop.f32.mrf.mxu0
  %v758 = vadd.f32 0.0, %v757
  %v759 = vpop.f32.mrf.mxu0
  %760 = vdwg.mxu0
  %v761 = vadd.f32 %v460, %v758
  %v762 = vxor.u32 %v761, 2147483648
  %v763 = vmul.f32 %v762, 1.442695
  %v764 = vpow.pop %v763
  %v765 = vadd.f32 %v764, 1.0
  %v766 = vrcp.pop %v765
  %v767 = vmul.f32 1.0, %v766
  %v768 = vtanh.pop %v761
  %769 = vrot.lane.b32.xlu0 %v768, 64
  %v770 = vpop.permute.xlu0 %769
  %v771 = vmul.f32 %v767, %v770
  %v772 = vmul.f32 %v767, %v679
  %774 = vrot.lane.b32.xlu0 %v771, 32
  %v775 = vpop.permute.xlu0 %774
  %v777 = vadd.f32 %v772, %v775
  %v778 = vtanh.pop %v777
  %780 = vrot.lane.b32.xlu0 %v778, 64
  %v781 = vpop.permute.xlu0 %780
  %v783 = vmul.f32 %v767, %v781
  %785 = vrot.lane.b32.xlu0 %v783, 32
  %v786 = vpop.permute.xlu0 %785
  %v787 = vsel %vm56, %v786, 0
  %789 = vmatprep.subr.mxu0 0.0
  %790 = vmatpush1.msra.mxu0 0.0
  %791 = vmatprep.subr.mxu0 0.0
  %792 = vmatpush1.msra.mxu0 0.0
  %793 = vmatprep.subr.mxu0 0.0
  %794 = vmatpush1.msra.mxu0 0.0
  %795 = vmatprep.subr.mxu0 0.0
  %796 = vmatpush1.msra.mxu0 0.0
  %797 = vmatprep.subr.mxu0 0.0
  %798 = vmatpush1.msra.mxu0 0.0
  %799 = vmatprep.subr.mxu0 0.0
  %800 = vmatpush1.msra.mxu0 0.0
  %801 = vmatprep.subr.mxu0 0.0
  %802 = vmatpush1.msra.mxu0 0.0
  %803 = vmatprep.subr.mxu0 0.0
  %804 = vmatpush1.msra.mxu0 0.0
  %805 = vmatprep.subr.mxu0 0.0
  %806 = vmatpush1.msra.mxu0 0.0
  %807 = vmatprep.subr.mxu0 0.0
  %808 = vmatpush1.msra.mxu0 0.0
  %809 = vmatprep.subr.mxu0 0.0
  %810 = vmatpush1.msra.mxu0 0.0
  %811 = vmatprep.subr.mxu0 0.0
  %812 = vmatpush1.msra.mxu0 0.0
  %813 = vmatprep.subr.mxu0 0.0
  %814 = vmatpush1.msra.mxu0 %v491
  %815 = vmatprep.subr.mxu0 0.0
  %816 = vmatpush1.msra.mxu0 %v490
  %817 = vmatprep.subr.mxu0 0.0
  %818 = vmatpush1.msra.mxu0 %v489
  %819 = vmatprep.subr.mxu0 0.0
  %820 = vmatpush1.msra.mxu0 %v488
  %821 = vmatprep.subr.mxu0 0.0
  %822 = vmatpush2.msra.mxu0 0.0
  %823 = vmatprep.subr.mxu0 0.0
  %824 = vmatpush2.msra.mxu0 0.0
  %825 = vmatprep.subr.mxu0 0.0
  %826 = vmatpush2.msra.mxu0 0.0
  %827 = vmatprep.subr.mxu0 0.0
  %828 = vmatpush2.msra.mxu0 0.0
  %829 = vmatprep.subr.mxu0 0.0
  %830 = vmatpush2.msra.mxu0 0.0
  %831 = vmatprep.subr.mxu0 0.0
  %832 = vmatpush2.msra.mxu0 0.0
  %833 = vmatprep.subr.mxu0 0.0
  %834 = vmatpush2.msra.mxu0 0.0
  %835 = vmatprep.subr.mxu0 0.0
  %836 = vmatpush2.msra.mxu0 0.0
  %837 = vmatprep.subr.mxu0 0.0
  %838 = vmatpush2.msra.mxu0 0.0
  %839 = vmatprep.subr.mxu0 0.0
  %840 = vmatpush2.msra.mxu0 0.0
  %841 = vmatprep.subr.mxu0 0.0
  %842 = vmatpush2.msra.mxu0 0.0
  %843 = vmatprep.subr.mxu0 0.0
  %844 = vmatpush2.msra.mxu0 0.0
  %845 = vmatprep.subr.mxu0 0.0
  %846 = vmatpush2.msra.mxu0 0.0
  %847 = vmatprep.subr.mxu0 0.0
  %848 = vmatpush2.msra.mxu0 0.0
  %849 = vmatprep.subr.mxu0 0.0
  %850 = vmatpush2.msra.mxu0 0.0
  %851 = vmatprep.subr.mxu0 0.0
  %852 = vmatpush2.msra.mxu0 0.0
  %853 = vmatprep.mubr.f32.mxu0 0.0
  %854 = vmatmul.mubr.f32.gmra.mxu0 %v787
  %v855 = vpop.f32.mrf.mxu0
  %v856 = vadd.f32 0.0, %v855
  %v857 = vpop.f32.mrf.mxu0
  %858 = vdwg.mxu0
  %v859 = vadd.f32 %v465, %v856
  %v860 = vxor.u32 %v859, 2147483648
  %v861 = vmul.f32 %v860, 1.442695
  %v862 = vpow.pop %v861
  %v863 = vadd.f32 %v862, 1.0
  %v864 = vrcp.pop %v863
  %v865 = vmul.f32 1.0, %v864
  %v866 = vtanh.pop %v859
  %867 = vrot.lane.b32.xlu0 %v866, 64
  %v868 = vpop.permute.xlu0 %867
  %v869 = vmul.f32 %v865, %v868
  %v870 = vmul.f32 %v865, %v777
  %872 = vrot.lane.b32.xlu0 %v869, 32
  %v873 = vpop.permute.xlu0 %872
  %v875 = vadd.f32 %v870, %v873
  %v876 = vtanh.pop %v875
  %878 = vrot.lane.b32.xlu0 %v876, 64
  %v879 = vpop.permute.xlu0 %878
  %v881 = vmul.f32 %v865, %v879
  %883 = vrot.lane.b32.xlu0 %v881, 32
  %v884 = vpop.permute.xlu0 %883
  %v885 = vsel %vm56, %v884, 0
  %887 = vmatprep.subr.mxu0 0.0
  %888 = vmatpush1.msra.mxu0 0.0
  %889 = vmatprep.subr.mxu0 0.0
  %890 = vmatpush1.msra.mxu0 0.0
  %891 = vmatprep.subr.mxu0 0.0
  %892 = vmatpush1.msra.mxu0 0.0
  %893 = vmatprep.subr.mxu0 0.0
  %894 = vmatpush1.msra.mxu0 0.0
  %895 = vmatprep.subr.mxu0 0.0
  %896 = vmatpush1.msra.mxu0 0.0
  %897 = vmatprep.subr.mxu0 0.0
  %898 = vmatpush1.msra.mxu0 0.0
  %899 = vmatprep.subr.mxu0 0.0
  %900 = vmatpush1.msra.mxu0 0.0
  %901 = vmatprep.subr.mxu0 0.0
  %902 = vmatpush1.msra.mxu0 0.0
  %903 = vmatprep.subr.mxu0 0.0
  %904 = vmatpush1.msra.mxu0 0.0
  %905 = vmatprep.subr.mxu0 0.0
  %906 = vmatpush1.msra.mxu0 0.0
  %907 = vmatprep.subr.mxu0 0.0
  %908 = vmatpush1.msra.mxu0 0.0
  %909 = vmatprep.subr.mxu0 0.0
  %910 = vmatpush1.msra.mxu0 0.0
  %911 = vmatprep.subr.mxu0 0.0
  %912 = vmatpush1.msra.mxu0 %v491
  %913 = vmatprep.subr.mxu0 0.0
  %914 = vmatpush1.msra.mxu0 %v490
  %915 = vmatprep.subr.mxu0 0.0
  %916 = vmatpush1.msra.mxu0 %v489
  %917 = vmatprep.subr.mxu0 0.0
  %918 = vmatpush1.msra.mxu0 %v488
  %919 = vmatprep.subr.mxu0 0.0
  %920 = vmatpush2.msra.mxu0 0.0
  %921 = vmatprep.subr.mxu0 0.0
  %922 = vmatpush2.msra.mxu0 0.0
  %923 = vmatprep.subr.mxu0 0.0
  %924 = vmatpush2.msra.mxu0 0.0
  %925 = vmatprep.subr.mxu0 0.0
  %926 = vmatpush2.msra.mxu0 0.0
  %927 = vmatprep.subr.mxu0 0.0
  %928 = vmatpush2.msra.mxu0 0.0
  %929 = vmatprep.subr.mxu0 0.0
  %930 = vmatpush2.msra.mxu0 0.0
  %931 = vmatprep.subr.mxu0 0.0
  %932 = vmatpush2.msra.mxu0 0.0
  %933 = vmatprep.subr.mxu0 0.0
  %934 = vmatpush2.msra.mxu0 0.0
  %935 = vmatprep.subr.mxu0 0.0
  %936 = vmatpush2.msra.mxu0 0.0
  %937 = vmatprep.subr.mxu0 0.0
  %938 = vmatpush2.msra.mxu0 0.0
  %939 = vmatprep.subr.mxu0 0.0
  %940 = vmatpush2.msra.mxu0 0.0
  %941 = vmatprep.subr.mxu0 0.0
  %942 = vmatpush2.msra.mxu0 0.0
  %943 = vmatprep.subr.mxu0 0.0
  %944 = vmatpush2.msra.mxu0 0.0
  %945 = vmatprep.subr.mxu0 0.0
  %946 = vmatpush2.msra.mxu0 0.0
  %947 = vmatprep.subr.mxu0 0.0
  %948 = vmatpush2.msra.mxu0 0.0
  %949 = vmatprep.subr.mxu0 0.0
  %950 = vmatpush2.msra.mxu0 0.0
  %951 = vmatprep.mubr.f32.mxu0 0.0
  %952 = vmatmul.mubr.f32.gmra.mxu0 %v885
  %v953 = vpop.f32.mrf.mxu0
  %v954 = vadd.f32 0.0, %v953
  %v955 = vpop.f32.mrf.mxu0
  %956 = vdwg.mxu0
  %v957 = vadd.f32 %v470, %v954
  %v958 = vxor.u32 %v957, 2147483648
  %v959 = vmul.f32 %v958, 1.442695
  %v960 = vpow.pop %v959
  %v961 = vadd.f32 %v960, 1.0
  %v962 = vrcp.pop %v961
  %v963 = vmul.f32 1.0, %v962
  %v964 = vtanh.pop %v957
  %965 = vrot.lane.b32.xlu0 %v964, 64
  %v966 = vpop.permute.xlu0 %965
  %v967 = vmul.f32 %v963, %v966
  %v968 = vmul.f32 %v963, %v875
  %970 = vrot.lane.b32.xlu0 %v967, 32
  %v971 = vpop.permute.xlu0 %970
  %v973 = vadd.f32 %v968, %v971
  %v974 = vtanh.pop %v973
  %976 = vrot.lane.b32.xlu0 %v974, 64
  %v977 = vpop.permute.xlu0 %976
  %v979 = vmul.f32 %v963, %v977
  %981 = vrot.lane.b32.xlu0 %v979, 32
  %v982 = vpop.permute.xlu0 %981
  %v983 = vsel %vm56, %v982, 0
  %985 = vmatprep.subr.mxu0 0.0
  %986 = vmatpush1.msra.mxu0 0.0
  %987 = vmatprep.subr.mxu0 0.0
  %988 = vmatpush1.msra.mxu0 0.0
  %989 = vmatprep.subr.mxu0 0.0
  %990 = vmatpush1.msra.mxu0 0.0
  %991 = vmatprep.subr.mxu0 0.0
  %992 = vmatpush1.msra.mxu0 0.0
  %993 = vmatprep.subr.mxu0 0.0
  %994 = vmatpush1.msra.mxu0 0.0
  %995 = vmatprep.subr.mxu0 0.0
  %996 = vmatpush1.msra.mxu0 0.0
  %997 = vmatprep.subr.mxu0 0.0
  %998 = vmatpush1.msra.mxu0 0.0
  %999 = vmatprep.subr.mxu0 0.0
  %1000 = vmatpush1.msra.mxu0 0.0
  %1001 = vmatprep.subr.mxu0 0.0
  %1002 = vmatpush1.msra.mxu0 0.0
  %1003 = vmatprep.subr.mxu0 0.0
  %1004 = vmatpush1.msra.mxu0 0.0
  %1005 = vmatprep.subr.mxu0 0.0
  %1006 = vmatpush1.msra.mxu0 0.0
  %1007 = vmatprep.subr.mxu0 0.0
  %1008 = vmatpush1.msra.mxu0 0.0
  %1009 = vmatprep.subr.mxu0 0.0
  %1010 = vmatpush1.msra.mxu0 %v491
  %1011 = vmatprep.subr.mxu0 0.0
  %1012 = vmatpush1.msra.mxu0 %v490
  %1013 = vmatprep.subr.mxu0 0.0
  %1014 = vmatpush1.msra.mxu0 %v489
  %1015 = vmatprep.subr.mxu0 0.0
  %1016 = vmatpush1.msra.mxu0 %v488
  %1017 = vmatprep.subr.mxu0 0.0
  %1018 = vmatpush2.msra.mxu0 0.0
  %1019 = vmatprep.subr.mxu0 0.0
  %1020 = vmatpush2.msra.mxu0 0.0
  %1021 = vmatprep.subr.mxu0 0.0
  %1022 = vmatpush2.msra.mxu0 0.0
  %1023 = vmatprep.subr.mxu0 0.0
  %1024 = vmatpush2.msra.mxu0 0.0
  %1025 = vmatprep.subr.mxu0 0.0
  %1026 = vmatpush2.msra.mxu0 0.0
  %1027 = vmatprep.subr.mxu0 0.0
  %1028 = vmatpush2.msra.mxu0 0.0
  %1029 = vmatprep.subr.mxu0 0.0
  %1030 = vmatpush2.msra.mxu0 0.0
  %1031 = vmatprep.subr.mxu0 0.0
  %1032 = vmatpush2.msra.mxu0 0.0
  %1033 = vmatprep.subr.mxu0 0.0
  %1034 = vmatpush2.msra.mxu0 0.0
  %1035 = vmatprep.subr.mxu0 0.0
  %1036 = vmatpush2.msra.mxu0 0.0
  %1037 = vmatprep.subr.mxu0 0.0
  %1038 = vmatpush2.msra.mxu0 0.0
  %1039 = vmatprep.subr.mxu0 0.0
  %1040 = vmatpush2.msra.mxu0 0.0
  %1041 = vmatprep.subr.mxu0 0.0
  %1042 = vmatpush2.msra.mxu0 0.0
  %1043 = vmatprep.subr.mxu0 0.0
  %1044 = vmatpush2.msra.mxu0 0.0
  %1045 = vmatprep.subr.mxu0 0.0
  %1046 = vmatpush2.msra.mxu0 0.0
  %1047 = vmatprep.subr.mxu0 0.0
  %1048 = vmatpush2.msra.mxu0 0.0
  %1049 = vmatprep.mubr.f32.mxu0 0.0
  %1050 = vmatmul.mubr.f32.gmra.mxu0 %v983
  %v1051 = vpop.f32.mrf.mxu0
  %v1052 = vadd.f32 0.0, %v1051
  %v1053 = vpop.f32.mrf.mxu0
  %1054 = vdwg.mxu0
  %v1055 = vadd.f32 %v475, %v1052
  %v1056 = vxor.u32 %v1055, 2147483648
  %v1057 = vmul.f32 %v1056, 1.442695
  %v1058 = vpow.pop %v1057
  %v1059 = vadd.f32 %v1058, 1.0
  %v1060 = vrcp.pop %v1059
  %v1061 = vmul.f32 1.0, %v1060
  %v1062 = vtanh.pop %v1055
  %1063 = vrot.lane.b32.xlu0 %v1062, 64
  %v1064 = vpop.permute.xlu0 %1063
  %v1065 = vmul.f32 %v1061, %v1064
  %v1066 = vmul.f32 %v1061, %v973
  %1068 = vrot.lane.b32.xlu0 %v1065, 32
  %v1069 = vpop.permute.xlu0 %1068
  %v1071 = vadd.f32 %v1066, %v1069
  %v1072 = vtanh.pop %v1071
  %1074 = vrot.lane.b32.xlu0 %v1072, 64
  %v1075 = vpop.permute.xlu0 %1074
  %v1077 = vmul.f32 %v1061, %v1075
  %1079 = vrot.lane.b32.xlu0 %v1077, 32
  %v1080 = vpop.permute.xlu0 %1079
  %v1081 = vsel %vm56, %v1080, 0
  %1083 = vmatprep.subr.mxu0 0.0
  %1084 = vmatpush1.msra.mxu0 0.0
  %1085 = vmatprep.subr.mxu0 0.0
  %1086 = vmatpush1.msra.mxu0 0.0
  %1087 = vmatprep.subr.mxu0 0.0
  %1088 = vmatpush1.msra.mxu0 0.0
  %1089 = vmatprep.subr.mxu0 0.0
  %1090 = vmatpush1.msra.mxu0 0.0
  %1091 = vmatprep.subr.mxu0 0.0
  %1092 = vmatpush1.msra.mxu0 0.0
  %1093 = vmatprep.subr.mxu0 0.0
  %1094 = vmatpush1.msra.mxu0 0.0
  %1095 = vmatprep.subr.mxu0 0.0
  %1096 = vmatpush1.msra.mxu0 0.0
  %1097 = vmatprep.subr.mxu0 0.0
  %1098 = vmatpush1.msra.mxu0 0.0
  %1099 = vmatprep.subr.mxu0 0.0
  %1100 = vmatpush1.msra.mxu0 0.0
  %1101 = vmatprep.subr.mxu0 0.0
  %1102 = vmatpush1.msra.mxu0 0.0
  %1103 = vmatprep.subr.mxu0 0.0
  %1104 = vmatpush1.msra.mxu0 0.0
  %1105 = vmatprep.subr.mxu0 0.0
  %1106 = vmatpush1.msra.mxu0 0.0
  %1107 = vmatprep.subr.mxu0 0.0
  %1108 = vmatpush1.msra.mxu0 %v491
  %1109 = vmatprep.subr.mxu0 0.0
  %1110 = vmatpush1.msra.mxu0 %v490
  %1111 = vmatprep.subr.mxu0 0.0
  %1112 = vmatpush1.msra.mxu0 %v489
  %1113 = vmatprep.subr.mxu0 0.0
  %1114 = vmatpush1.msra.mxu0 %v488
  %1115 = vmatprep.subr.mxu0 0.0
  %1116 = vmatpush2.msra.mxu0 0.0
  %1117 = vmatprep.subr.mxu0 0.0
  %1118 = vmatpush2.msra.mxu0 0.0
  %1119 = vmatprep.subr.mxu0 0.0
  %1120 = vmatpush2.msra.mxu0 0.0
  %1121 = vmatprep.subr.mxu0 0.0
  %1122 = vmatpush2.msra.mxu0 0.0
  %1123 = vmatprep.subr.mxu0 0.0
  %1124 = vmatpush2.msra.mxu0 0.0
  %1125 = vmatprep.subr.mxu0 0.0
  %1126 = vmatpush2.msra.mxu0 0.0
  %1127 = vmatprep.subr.mxu0 0.0
  %1128 = vmatpush2.msra.mxu0 0.0
  %1129 = vmatprep.subr.mxu0 0.0
  %1130 = vmatpush2.msra.mxu0 0.0
  %1131 = vmatprep.subr.mxu0 0.0
  %1132 = vmatpush2.msra.mxu0 0.0
  %1133 = vmatprep.subr.mxu0 0.0
  %1134 = vmatpush2.msra.mxu0 0.0
  %1135 = vmatprep.subr.mxu0 0.0
  %1136 = vmatpush2.msra.mxu0 0.0
  %1137 = vmatprep.subr.mxu0 0.0
  %1138 = vmatpush2.msra.mxu0 0.0
  %1139 = vmatprep.subr.mxu0 0.0
  %1140 = vmatpush2.msra.mxu0 0.0
  %1141 = vmatprep.subr.mxu0 0.0
  %1142 = vmatpush2.msra.mxu0 0.0
  %1143 = vmatprep.subr.mxu0 0.0
  %1144 = vmatpush2.msra.mxu0 0.0
  %1145 = vmatprep.subr.mxu0 0.0
  %1146 = vmatpush2.msra.mxu0 0.0
  %1147 = vmatprep.mubr.f32.mxu0 0.0
  %1148 = vmatmul.mubr.f32.gmra.mxu0 %v1081
  %v1149 = vpop.f32.mrf.mxu0
  %v1150 = vadd.f32 0.0, %v1149
  %v1151 = vpop.f32.mrf.mxu0
  %1152 = vdwg.mxu0
  %v1153 = vadd.f32 %v480, %v1150
  %v1154 = vxor.u32 %v1153, 2147483648
  %v1155 = vmul.f32 %v1154, 1.442695
  %v1156 = vpow.pop %v1155
  %v1157 = vadd.f32 %v1156, 1.0
  %v1158 = vrcp.pop %v1157
  %v1159 = vmul.f32 1.0, %v1158
  %v1160 = vtanh.pop %v1153
  %1161 = vrot.lane.b32.xlu0 %v1160, 64
  %v1162 = vpop.permute.xlu0 %1161
  %v1163 = vmul.f32 %v1159, %v1162
  %v1164 = vmul.f32 %v1159, %v1071
  %1166 = vrot.lane.b32.xlu0 %v1163, 32
  %v1167 = vpop.permute.xlu0 %1166
  %v1169 = vadd.f32 %v1164, %v1167
  %v1170 = vtanh.pop %v1169
  %1172 = vrot.lane.b32.xlu0 %v1170, 64
  %v1173 = vpop.permute.xlu0 %1172
  %v1175 = vmul.f32 %v1159, %v1173
  %1177 = vrot.lane.b32.xlu0 %v1175, 32
  %v1178 = vpop.permute.xlu0 %1177
  %v1179 = vsel %vm56, %v1178, 0
  %1181 = vmatprep.subr.mxu0 0.0
  %1182 = vmatpush1.msra.mxu0 0.0
  %1183 = vmatprep.subr.mxu0 0.0
  %1184 = vmatpush1.msra.mxu0 0.0
  %1185 = vmatprep.subr.mxu0 0.0
  %1186 = vmatpush1.msra.mxu0 0.0
  %1187 = vmatprep.subr.mxu0 0.0
  %1188 = vmatpush1.msra.mxu0 0.0
  %1189 = vmatprep.subr.mxu0 0.0
  %1190 = vmatpush1.msra.mxu0 0.0
  %1191 = vmatprep.subr.mxu0 0.0
  %1192 = vmatpush1.msra.mxu0 0.0
  %1193 = vmatprep.subr.mxu0 0.0
  %1194 = vmatpush1.msra.mxu0 0.0
  %1195 = vmatprep.subr.mxu0 0.0
  %1196 = vmatpush1.msra.mxu0 0.0
  %1197 = vmatprep.subr.mxu0 0.0
  %1198 = vmatpush1.msra.mxu0 0.0
  %1199 = vmatprep.subr.mxu0 0.0
  %1200 = vmatpush1.msra.mxu0 0.0
  %1201 = vmatprep.subr.mxu0 0.0
  %1202 = vmatpush1.msra.mxu0 0.0
  %1203 = vmatprep.subr.mxu0 0.0
  %1204 = vmatpush1.msra.mxu0 0.0
  %1205 = vmatprep.subr.mxu0 0.0
  %1206 = vmatpush1.msra.mxu0 %v491
  %1207 = vmatprep.subr.mxu0 0.0
  %1208 = vmatpush1.msra.mxu0 %v490
  %1209 = vmatprep.subr.mxu0 0.0
  %1210 = vmatpush1.msra.mxu0 %v489
  %1211 = vmatprep.subr.mxu0 0.0
  %1212 = vmatpush1.msra.mxu0 %v488
  %1213 = vmatprep.subr.mxu0 0.0
  %1214 = vmatpush2.msra.mxu0 0.0
  %1215 = vmatprep.subr.mxu0 0.0
  %1216 = vmatpush2.msra.mxu0 0.0
  %1217 = vmatprep.subr.mxu0 0.0
  %1218 = vmatpush2.msra.mxu0 0.0
  %1219 = vmatprep.subr.mxu0 0.0
  %1220 = vmatpush2.msra.mxu0 0.0
  %1221 = vmatprep.subr.mxu0 0.0
  %1222 = vmatpush2.msra.mxu0 0.0
  %1223 = vmatprep.subr.mxu0 0.0
  %1224 = vmatpush2.msra.mxu0 0.0
  %1225 = vmatprep.subr.mxu0 0.0
  %1226 = vmatpush2.msra.mxu0 0.0
  %1227 = vmatprep.subr.mxu0 0.0
  %1228 = vmatpush2.msra.mxu0 0.0
  %1229 = vmatprep.subr.mxu0 0.0
  %1230 = vmatpush2.msra.mxu0 0.0
  %1231 = vmatprep.subr.mxu0 0.0
  %1232 = vmatpush2.msra.mxu0 0.0
  %1233 = vmatprep.subr.mxu0 0.0
  %1234 = vmatpush2.msra.mxu0 0.0
  %1235 = vmatprep.subr.mxu0 0.0
  %1236 = vmatpush2.msra.mxu0 0.0
  %1237 = vmatprep.subr.mxu0 0.0
  %1238 = vmatpush2.msra.mxu0 0.0
  %1239 = vmatprep.subr.mxu0 0.0
  %1240 = vmatpush2.msra.mxu0 0.0
  %1241 = vmatprep.subr.mxu0 0.0
  %1242 = vmatpush2.msra.mxu0 0.0
  %1243 = vmatprep.subr.mxu0 0.0
  %1244 = vmatpush2.msra.mxu0 0.0
  %1245 = vmatprep.mubr.f32.mxu0 0.0
  %1246 = vmatmul.mubr.f32.gmra.mxu0 %v1179
  %v1247 = vpop.f32.mrf.mxu0
  %v1248 = vadd.f32 0.0, %v1247
  %v1249 = vpop.f32.mrf.mxu0
  %1250 = vdwg.mxu0
  %v1251 = vadd.f32 %v485, %v1248
  %v1252 = vxor.u32 %v1251, 2147483648
  %v1253 = vmul.f32 %v1252, 1.442695
  %v1254 = vpow.pop %v1253
  %v1255 = vadd.f32 %v1254, 1.0
  %v1256 = vrcp.pop %v1255
  %v1257 = vmul.f32 1.0, %v1256
  %v1258 = vtanh.pop %v1251
  %1259 = vrot.lane.b32.xlu0 %v1258, 64
  %v1260 = vpop.permute.xlu0 %1259
  %v1261 = vmul.f32 %v1257, %v1260
  %v1262 = vmul.f32 %v1257, %v1169
  %1264 = vrot.lane.b32.xlu0 %v1261, 32
  %v1265 = vpop.permute.xlu0 %1264
  %v1267 = vadd.f32 %v1262, %v1265
  %v1268 = vtanh.pop %v1267
  %1270 = vrot.lane.b32.xlu0 %v1268, 64
  %v1271 = vpop.permute.xlu0 %1270
  %v1273 = vmul.f32 %v1257, %v1271
  %v1274 = vld [vmem:[%s8] sm:$0xff]
  %v1275 = vld [vmem:[%s8 + $0x8] sm:$0xff]
  %v1276 = vld [vmem:[%s8 + $0x10] sm:$0xff]
  %v1277 = vld [vmem:[%s8 + $0x18] sm:$0xff]
  %v1278 = vld [vmem:[%s9] sm:$0x1]
  %v1280 = vlaneseq
  %v1281 = vshrl.u32 %v1280, 7
  %v1282 = vsub.s32 0, %v1281
  %v1283 = vrot.slane %v1278, %v1282
  %1286 = vrot.lane.b32.xlu0 %v1273, 32
  %v1287 = vpop.permute.xlu0 %1286
  %v1288 = vsel %vm56, %v1287, 0
  %1290 = vmatprep.subr.mxu0 0.0
  %1291 = vmatpush1.msra.mxu0 0.0
  %1292 = vmatprep.subr.mxu0 0.0
  %1293 = vmatpush1.msra.mxu0 0.0
  %1294 = vmatprep.subr.mxu0 0.0
  %1295 = vmatpush1.msra.mxu0 0.0
  %1296 = vmatprep.subr.mxu0 0.0
  %1297 = vmatpush1.msra.mxu0 0.0
  %1298 = vmatprep.subr.mxu0 0.0
  %1299 = vmatpush1.msra.mxu0 0.0
  %1300 = vmatprep.subr.mxu0 0.0
  %1301 = vmatpush1.msra.mxu0 0.0
  %1302 = vmatprep.subr.mxu0 0.0
  %1303 = vmatpush1.msra.mxu0 0.0
  %1304 = vmatprep.subr.mxu0 0.0
  %1305 = vmatpush1.msra.mxu0 0.0
  %1306 = vmatprep.subr.mxu0 0.0
  %1307 = vmatpush1.msra.mxu0 0.0
  %1308 = vmatprep.subr.mxu0 0.0
  %1309 = vmatpush1.msra.mxu0 0.0
  %1310 = vmatprep.subr.mxu0 0.0
  %1311 = vmatpush1.msra.mxu0 0.0
  %1312 = vmatprep.subr.mxu0 0.0
  %1313 = vmatpush1.msra.mxu0 0.0
  %1314 = vmatprep.subr.mxu0 0.0
  %1315 = vmatpush1.msra.mxu0 %v1277
  %1316 = vmatprep.subr.mxu0 0.0
  %1317 = vmatpush1.msra.mxu0 %v1276
  %1318 = vmatprep.subr.mxu0 0.0
  %1319 = vmatpush1.msra.mxu0 %v1275
  %1320 = vmatprep.subr.mxu0 0.0
  %1321 = vmatpush1.msra.mxu0 %v1274
  %1322 = vmatprep.subr.mxu0 0.0
  %1323 = vmatpush2.msra.mxu0 0.0
  %1324 = vmatprep.subr.mxu0 0.0
  %1325 = vmatpush2.msra.mxu0 0.0
  %1326 = vmatprep.subr.mxu0 0.0
  %1327 = vmatpush2.msra.mxu0 0.0
  %1328 = vmatprep.subr.mxu0 0.0
  %1329 = vmatpush2.msra.mxu0 0.0
  %1330 = vmatprep.subr.mxu0 0.0
  %1331 = vmatpush2.msra.mxu0 0.0
  %1332 = vmatprep.subr.mxu0 0.0
  %1333 = vmatpush2.msra.mxu0 0.0
  %1334 = vmatprep.subr.mxu0 0.0
  %1335 = vmatpush2.msra.mxu0 0.0
  %1336 = vmatprep.subr.mxu0 0.0
  %1337 = vmatpush2.msra.mxu0 0.0
  %1338 = vmatprep.subr.mxu0 0.0
  %1339 = vmatpush2.msra.mxu0 0.0
  %1340 = vmatprep.subr.mxu0 0.0
  %1341 = vmatpush2.msra.mxu0 0.0
  %1342 = vmatprep.subr.mxu0 0.0
  %1343 = vmatpush2.msra.mxu0 0.0
  %1344 = vmatprep.subr.mxu0 0.0
  %1345 = vmatpush2.msra.mxu0 0.0
  %1346 = vmatprep.subr.mxu0 0.0
  %1347 = vmatpush2.msra.mxu0 0.0
  %1348 = vmatprep.subr.mxu0 0.0
  %1349 = vmatpush2.msra.mxu0 0.0
  %1350 = vmatprep.subr.mxu0 0.0
  %1351 = vmatpush2.msra.mxu0 0.0
  %1352 = vmatprep.subr.mxu0 0.0
  %1353 = vmatpush2.msra.mxu0 0.0
  %1354 = vmatprep.mubr.f32.mxu0 0.0
  %1355 = vmatmul.mubr.f32.gmra.mxu0 %v1288
  %v1356 = vpop.f32.mrf.mxu0
  %v1357 = vadd.f32 %v1283, %v1356
  %v1358 = vpop.f32.mrf.mxu0
  %1359 = vdwg.mxu0
  %1360 = vst [vmem:[%s10] sm:$0xff] %v1357
  // Predicated region
  $region42: #{_forward.1} parent=0 // pred_check
    _
  $region43: #{_forward.1} parent=0 // pred_check_branch
    %1362 = sbr.rel (0) target = $region45
  $region44: #{_forward.1} parent=0 // pred_region
    _
  $region45: #{_forward.1} parent=0 // pred_fallthru
    _
  // Predicated region
  $region46: #{_forward.1} parent=0 // pred_check
    _
  $region47: #{_forward.1} parent=0 // pred_check_branch
    %1364 = sbr.rel (0) target = $region49
  $region48: #{_forward.1} parent=0 // pred_region
    _
  $region49: #{_forward.1} parent=0 // pred_fallthru
    _

</llo_original>
